<compile_context>
chip_gen: v6e
topology: v6e:2x2x1
jax: 0.10.0
libtpu: 0.0.40
codegen_flags: <defaults>
</compile_context>

<pallas_src>
import jax
import jax.numpy as jnp
from jax.experimental import pallas as pl
from jax.experimental.pallas import tpu as pltpu

LANE = 128   # node dim and hidden dim are both MXU contraction dims -> pad to 128


def _pad_axis(x, axis, mult):
    pad = (-x.shape[axis]) % mult
    if pad == 0:
        return x
    widths = [(0, 0)] * x.ndim
    widths[axis] = (0, pad)
    return jnp.pad(x, widths)


# ------------------------------------------------------------------ kernel --

def rgcn_fused_kernel(a_ref, invdeg_ref, w1_ref, rootb1_ref, w2_ref,
                      root2_ref, b2_ref, out_ref):
    """Fused 2-layer RGCN forward (single invocation, relations unrolled).

      h1  = leaky_relu( sum_r invdeg_r ⊙ (A_r @ W1_r) + (Root1 + b1) )
      out = sum_r (invdeg_r ⊙ (A_r @ h1)) @ W2_r + h1 @ Root2 + b2

    a_ref is the row-stacked (R*Np, Np) bf16 matrix of raw edge counts; the
    f32 per-(relation, node) 1/deg is applied after the MXU matmul (mean
    normalization is never rounded to bf16).  All matmuls use bf16 operands
    with f32 accumulation.
    """
    num_rels = w1_ref.shape[0]
    n_pad = a_ref.shape[1]

    # ---------------------------------------------------------------- layer 1
    acc1 = rootb1_ref[...]                                      # f32 (Np, Hp), b1 pre-folded
    for r in range(num_rels):                                   # static unroll over relations
        a_r = a_ref[r * n_pad:(r + 1) * n_pad, :]               # bf16 (Np, Np)
        agg = jnp.dot(a_r, w1_ref[r], preferred_element_type=jnp.float32)
        acc1 = acc1 + invdeg_ref[r * n_pad:(r + 1) * n_pad, :] * agg
    h1 = jnp.where(acc1 > 0, acc1, 0.01 * acc1)                 # F.leaky_relu default slope
    h1_bf = h1.astype(jnp.bfloat16)                             # live value, no VMEM scratch

    # ---------------------------------------------------------------- layer 2
    # One stacked (R*Np, Np) x (Np, Hp) matmul instead of R tiny K=32 matmuls.
    t = jnp.dot(a_ref[...], h1_bf, preferred_element_type=jnp.float32)
    t_bf = (t * invdeg_ref[...]).astype(jnp.bfloat16)           # f32 mean, then bf16 for MXU

    acc2 = jnp.dot(h1_bf, root2_ref[...],
                   preferred_element_type=jnp.float32) + b2_ref[...]
    for r in range(num_rels):                                   # K = Hp = 128, lane-dense
        acc2 = acc2 + jnp.dot(t_bf[r * n_pad:(r + 1) * n_pad, :], w2_ref[r],
                              preferred_element_type=jnp.float32)
    out_ref[...] = acc2


# ---------------------------------------------------------------- wrappers ---

def rgcn_fused(a2d, invdeg2d, w1, rootb1, w2, root2, b2):
    n_pad = a2d.shape[1]
    h_pad = w1.shape[-1]
    vmem = lambda: pl.BlockSpec(memory_space=pltpu.MemorySpace.VMEM)
    return pl.pallas_call(
        rgcn_fused_kernel,
        out_shape=jax.ShapeDtypeStruct((n_pad, h_pad), jnp.float32),
        in_specs=[vmem() for _ in range(7)],
        out_specs=vmem(),
        compiler_params=pltpu.CompilerParams(
            vmem_limit_bytes=32 * 1024 * 1024),
    )(a2d, invdeg2d, w1, rootb1, w2, root2, b2)


def build_relation_adjacency(edge_index, edge_type, num_nodes, num_rels):
    """A[r, i, j] = #edges j -> i of relation r (raw counts, NOT normalized).

    Counts are exactly representable in bf16 for multiplicities <= 256;
    normalization stays in f32 inside the kernel.
    """
    src = edge_index[0]
    dst = edge_index[1]
    A = jnp.zeros((num_rels, num_nodes, num_nodes), jnp.float32)
    A = A.at[edge_type, dst, src].add(1.0)
    return A


def rgcn_forward(edge_index, edge_type, params, num_nodes, num_rels):
    nhid = params["w1"].shape[-1]
    n_pad = num_nodes + (-num_nodes) % LANE     # node dim: M dim AND contraction dim
    h_pad = nhid + (-nhid) % LANE               # lane-dense hidden dim

    A = build_relation_adjacency(edge_index, edge_type, num_nodes, num_rels)
    A = _pad_axis(_pad_axis(A, 1, LANE), 2, LANE)                   # (R, Np, Np) f32 counts
    deg = A.sum(axis=2, keepdims=True)                              # (R, Np, 1)
    invdeg = jnp.where(deg > 0, 1.0 / jnp.maximum(deg, 1.0), 0.0)   # f32 per-relation 1/deg
    a2d = A.astype(jnp.bfloat16).reshape(num_rels * n_pad, n_pad)   # stacked bf16 counts
    invdeg2d = invdeg.reshape(num_rels * n_pad, 1)                  # f32

    w1 = _pad_axis(_pad_axis(params["w1"], 1, LANE), 2, LANE).astype(jnp.bfloat16)
    rootb1 = _pad_axis(_pad_axis(params["root1"] + params["b1"][None, :], 0, LANE),
                       1, LANE)                                     # f32, b1 pre-folded
    w2 = _pad_axis(_pad_axis(params["w2"], 1, LANE), 2, LANE).astype(jnp.bfloat16)
    root2 = _pad_axis(_pad_axis(params["root2"], 0, LANE), 1, LANE).astype(jnp.bfloat16)
    b2 = _pad_axis(params["b2"].reshape(1, -1), 1, LANE)            # f32

    out = rgcn_fused(a2d, invdeg2d, w1, rootb1, w2, root2, b2)
    return out[:num_nodes, :nhid]


def rgcn_reference(edge_index, edge_type, params, num_nodes, num_rels):
    """Pure-JAX f32 reference (same semantics as the PyTorch module)."""
    A = build_relation_adjacency(edge_index, edge_type, num_nodes, num_rels)
    deg = A.sum(axis=2, keepdims=True)
    An = A / jnp.maximum(deg, 1.0)
    h1 = (jnp.einsum("rij,rjh->ih", An, params["w1"])
          + params["root1"] + params["b1"])
    h1 = jnp.where(h1 > 0, h1, 0.01 * h1)
    msg = jnp.einsum("ij,rjh->rih", h1, params["w2"])
    h2 = (jnp.einsum("rij,rjh->ih", An, msg)
          + h1 @ params["root2"] + params["b2"])
    return h2


# ------------------------------------------------------------------- main ---

if __name__ == "__main__":
    num_nodes = 32     # in_channels of layer 1 (featureless -> one-hot ids)
    nhid = 32
    num_rels = 3
    num_edges = 64

    key = jax.random.PRNGKey(0)
    k_src, k_dst, k_rel, k1, k2, k3, k4 = jax.random.split(key, 7)

    edge_index = jnp.stack([
        jax.random.randint(k_src, (num_edges,), 0, num_nodes),
        jax.random.randint(k_dst, (num_edges,), 0, num_nodes),
    ], axis=0).astype(jnp.int32)                                      # (2, E)
    edge_type = jax.random.randint(k_rel, (num_edges,), 0,
                                   num_rels).astype(jnp.int32)        # (E,)

    # Deterministic glorot-ish parameter init (shapes follow RGCNConv).
    def glorot(k, shape):
        fan = shape[-2] + shape[-1]
        return jax.random.normal(k, shape, jnp.float32) * jnp.sqrt(2.0 / fan)

    params = {
        "w1": glorot(k1, (num_rels, num_nodes, nhid)),   # relation weights, layer 1
        "root1": glorot(k2, (num_nodes, nhid)),          # root weight, layer 1
        "b1": jnp.zeros((nhid,), jnp.float32),
        "w2": glorot(k3, (num_rels, nhid, nhid)),        # relation weights, layer 2
        "root2": glorot(k4, (nhid, nhid)),               # root weight, layer 2
        "b2": jnp.zeros((nhid,), jnp.float32),
    }

    out = rgcn_forward(edge_index, edge_type, params, num_nodes, num_rels)
    jax.block_until_ready(out)
    assert out.shape == (num_nodes, nhid)

    ref = rgcn_reference(edge_index, edge_type, params, num_nodes, num_rels)
    err = float(jnp.max(jnp.abs(out - ref)))
    assert err < 0.1, f"max abs err vs f32 reference too large: {err}"
    print("KERNEL_OK")
</pallas_src>

<mosaic_0001>
module attributes {stable_mosaic.version = 11 : i64} {
  func.func @rgcn_fused_kernel(%arg0: memref<384x128xbf16, #tpu.memory_space<vmem>>, %arg1: memref<384x1xf32, #tpu.memory_space<vmem>>, %arg2: memref<3x128x128xbf16, #tpu.memory_space<vmem>>, %arg3: memref<128x128xf32, #tpu.memory_space<vmem>>, %arg4: memref<3x128x128xbf16, #tpu.memory_space<vmem>>, %arg5: memref<128x128xbf16, #tpu.memory_space<vmem>>, %arg6: memref<1x128xf32, #tpu.memory_space<vmem>>, %arg7: memref<128x128xf32, #tpu.memory_space<vmem>>) attributes {dimension_semantics = [], scalar_prefetch = 0 : i64, scratch_operands = 0 : i64, tpu.core_type = #tpu.core_type<tc>} {
    %c0 = arith.constant 0 : index
    %c0_0 = arith.constant 0 : index
    %0 = vector.load %arg3[%c0, %c0_0] : memref<128x128xf32, #tpu.memory_space<vmem>>, vector<128x128xf32>
    %c0_1 = arith.constant 0 : index
    %c0_2 = arith.constant 0 : index
    %1 = vector.load %arg0[%c0_1, %c0_2] : memref<384x128xbf16, #tpu.memory_space<vmem>>, vector<128x128xbf16>
    %c0_3 = arith.constant 0 : index
    %c0_4 = arith.constant 0 : index
    %c0_5 = arith.constant 0 : index
    %2 = vector.load %arg2[%c0_3, %c0_4, %c0_5] : memref<3x128x128xbf16, #tpu.memory_space<vmem>>, vector<1x128x128xbf16>
    %3 = vector.shape_cast %2 : vector<1x128x128xbf16> to vector<128x128xbf16>
    %cst = arith.constant dense<0.000000e+00> : vector<128x128xf32>
    %4 = tpu.matmul %1, %3, %cst {dimension_numbers = #tpu.dot_dimension_numbers<[1], [0], [0], [1], [0, 0, 1, 1], [], []>} : vector<128x128xbf16>, vector<128x128xbf16>, vector<128x128xf32> -> vector<128x128xf32>
    %c0_6 = arith.constant 0 : index
    %c0_7 = arith.constant 0 : index
    %5 = vector.load %arg1[%c0_6, %c0_7] : memref<384x1xf32, #tpu.memory_space<vmem>>, vector<128x1xf32>
    %6 = vector.broadcast %5 : vector<128x1xf32> to vector<128x128xf32>
    %7 = arith.mulf %6, %4 : vector<128x128xf32>
    %8 = arith.addf %0, %7 : vector<128x128xf32>
    %c128 = arith.constant 128 : index
    %c0_8 = arith.constant 0 : index
    %9 = vector.load %arg0[%c128, %c0_8] : memref<384x128xbf16, #tpu.memory_space<vmem>>, vector<128x128xbf16>
    %c1 = arith.constant 1 : index
    %c0_9 = arith.constant 0 : index
    %c0_10 = arith.constant 0 : index
    %10 = vector.load %arg2[%c1, %c0_9, %c0_10] : memref<3x128x128xbf16, #tpu.memory_space<vmem>>, vector<1x128x128xbf16>
    %11 = vector.shape_cast %10 : vector<1x128x128xbf16> to vector<128x128xbf16>
    %cst_11 = arith.constant dense<0.000000e+00> : vector<128x128xf32>
    %12 = tpu.matmul %9, %11, %cst_11 {dimension_numbers = #tpu.dot_dimension_numbers<[1], [0], [0], [1], [0, 0, 1, 1], [], []>} : vector<128x128xbf16>, vector<128x128xbf16>, vector<128x128xf32> -> vector<128x128xf32>
    %c128_12 = arith.constant 128 : index
    %c0_13 = arith.constant 0 : index
    %13 = vector.load %arg1[%c128_12, %c0_13] : memref<384x1xf32, #tpu.memory_space<vmem>>, vector<128x1xf32>
    %14 = vector.broadcast %13 : vector<128x1xf32> to vector<128x128xf32>
    %15 = arith.mulf %14, %12 : vector<128x128xf32>
    %16 = arith.addf %8, %15 : vector<128x128xf32>
    %c256 = arith.constant 256 : index
    %c0_14 = arith.constant 0 : index
    %17 = vector.load %arg0[%c256, %c0_14] : memref<384x128xbf16, #tpu.memory_space<vmem>>, vector<128x128xbf16>
    %c2 = arith.constant 2 : index
    %c0_15 = arith.constant 0 : index
    %c0_16 = arith.constant 0 : index
    %18 = vector.load %arg2[%c2, %c0_15, %c0_16] : memref<3x128x128xbf16, #tpu.memory_space<vmem>>, vector<1x128x128xbf16>
    %19 = vector.shape_cast %18 : vector<1x128x128xbf16> to vector<128x128xbf16>
    %cst_17 = arith.constant dense<0.000000e+00> : vector<128x128xf32>
    %20 = tpu.matmul %17, %19, %cst_17 {dimension_numbers = #tpu.dot_dimension_numbers<[1], [0], [0], [1], [0, 0, 1, 1], [], []>} : vector<128x128xbf16>, vector<128x128xbf16>, vector<128x128xf32> -> vector<128x128xf32>
    %c256_18 = arith.constant 256 : index
    %c0_19 = arith.constant 0 : index
    %21 = vector.load %arg1[%c256_18, %c0_19] : memref<384x1xf32, #tpu.memory_space<vmem>>, vector<128x1xf32>
    %22 = vector.broadcast %21 : vector<128x1xf32> to vector<128x128xf32>
    %23 = arith.mulf %22, %20 : vector<128x128xf32>
    %24 = arith.addf %16, %23 : vector<128x128xf32>
    %cst_20 = arith.constant 0.000000e+00 : f32
    %25 = vector.broadcast %cst_20 : f32 to vector<128x128xf32>
    %26 = arith.cmpf ogt, %24, %25 : vector<128x128xf32>
    %cst_21 = arith.constant 0.00999999977 : f32
    %27 = vector.broadcast %cst_21 : f32 to vector<128x128xf32>
    %28 = arith.mulf %27, %24 : vector<128x128xf32>
    %29 = arith.select %26, %24, %28 : vector<128x128xi1>, vector<128x128xf32>
    %30 = arith.truncf %29 : vector<128x128xf32> to vector<128x128xbf16>
    %c0_22 = arith.constant 0 : index
    %c0_23 = arith.constant 0 : index
    %31 = vector.load %arg0[%c0_22, %c0_23] : memref<384x128xbf16, #tpu.memory_space<vmem>>, vector<384x128xbf16>
    %cst_24 = arith.constant dense<0.000000e+00> : vector<384x128xf32>
    %32 = tpu.matmul %31, %30, %cst_24 {dimension_numbers = #tpu.dot_dimension_numbers<[1], [0], [0], [1], [0, 0, 1, 1], [], []>} : vector<384x128xbf16>, vector<128x128xbf16>, vector<384x128xf32> -> vector<384x128xf32>
    %c0_25 = arith.constant 0 : index
    %c0_26 = arith.constant 0 : index
    %33 = vector.load %arg1[%c0_25, %c0_26] : memref<384x1xf32, #tpu.memory_space<vmem>>, vector<384x1xf32>
    %34 = vector.broadcast %33 : vector<384x1xf32> to vector<384x128xf32>
    %35 = arith.mulf %32, %34 : vector<384x128xf32>
    %36 = arith.truncf %35 : vector<384x128xf32> to vector<384x128xbf16>
    %c0_27 = arith.constant 0 : index
    %c0_28 = arith.constant 0 : index
    %37 = vector.load %arg5[%c0_27, %c0_28] : memref<128x128xbf16, #tpu.memory_space<vmem>>, vector<128x128xbf16>
    %cst_29 = arith.constant dense<0.000000e+00> : vector<128x128xf32>
    %38 = tpu.matmul %30, %37, %cst_29 {dimension_numbers = #tpu.dot_dimension_numbers<[1], [0], [0], [1], [0, 0, 1, 1], [], []>} : vector<128x128xbf16>, vector<128x128xbf16>, vector<128x128xf32> -> vector<128x128xf32>
    %c0_30 = arith.constant 0 : index
    %c0_31 = arith.constant 0 : index
    %39 = vector.load %arg6[%c0_30, %c0_31] : memref<1x128xf32, #tpu.memory_space<vmem>>, vector<1x128xf32>
    %40 = vector.broadcast %39 : vector<1x128xf32> to vector<128x128xf32>
    %41 = arith.addf %38, %40 : vector<128x128xf32>
    %42 = vector.extract_strided_slice %36 {offsets = [0, 0], sizes = [128, 128], strides = [1, 1]} : vector<384x128xbf16> to vector<128x128xbf16>
    %c0_32 = arith.constant 0 : index
    %c0_33 = arith.constant 0 : index
    %c0_34 = arith.constant 0 : index
    %43 = vector.load %arg4[%c0_32, %c0_33, %c0_34] : memref<3x128x128xbf16, #tpu.memory_space<vmem>>, vector<1x128x128xbf16>
    %44 = vector.shape_cast %43 : vector<1x128x128xbf16> to vector<128x128xbf16>
    %cst_35 = arith.constant dense<0.000000e+00> : vector<128x128xf32>
    %45 = tpu.matmul %42, %44, %cst_35 {dimension_numbers = #tpu.dot_dimension_numbers<[1], [0], [0], [1], [0, 0, 1, 1], [], []>} : vector<128x128xbf16>, vector<128x128xbf16>, vector<128x128xf32> -> vector<128x128xf32>
    %46 = arith.addf %41, %45 : vector<128x128xf32>
    %47 = vector.extract_strided_slice %36 {offsets = [128, 0], sizes = [128, 128], strides = [1, 1]} : vector<384x128xbf16> to vector<128x128xbf16>
    %c1_36 = arith.constant 1 : index
    %c0_37 = arith.constant 0 : index
    %c0_38 = arith.constant 0 : index
    %48 = vector.load %arg4[%c1_36, %c0_37, %c0_38] : memref<3x128x128xbf16, #tpu.memory_space<vmem>>, vector<1x128x128xbf16>
    %49 = vector.shape_cast %48 : vector<1x128x128xbf16> to vector<128x128xbf16>
    %cst_39 = arith.constant dense<0.000000e+00> : vector<128x128xf32>
    %50 = tpu.matmul %47, %49, %cst_39 {dimension_numbers = #tpu.dot_dimension_numbers<[1], [0], [0], [1], [0, 0, 1, 1], [], []>} : vector<128x128xbf16>, vector<128x128xbf16>, vector<128x128xf32> -> vector<128x128xf32>
    %51 = arith.addf %46, %50 : vector<128x128xf32>
    %52 = vector.extract_strided_slice %36 {offsets = [256, 0], sizes = [128, 128], strides = [1, 1]} : vector<384x128xbf16> to vector<128x128xbf16>
    %c2_40 = arith.constant 2 : index
    %c0_41 = arith.constant 0 : index
    %c0_42 = arith.constant 0 : index
    %53 = vector.load %arg4[%c2_40, %c0_41, %c0_42] : memref<3x128x128xbf16, #tpu.memory_space<vmem>>, vector<1x128x128xbf16>
    %54 = vector.shape_cast %53 : vector<1x128x128xbf16> to vector<128x128xbf16>
    %cst_43 = arith.constant dense<0.000000e+00> : vector<128x128xf32>
    %55 = tpu.matmul %52, %54, %cst_43 {dimension_numbers = #tpu.dot_dimension_numbers<[1], [0], [0], [1], [0, 0, 1, 1], [], []>} : vector<128x128xbf16>, vector<128x128xbf16>, vector<128x128xf32> -> vector<128x128xf32>
    %56 = arith.addf %51, %55 : vector<128x128xf32>
    %c0_44 = arith.constant 0 : index
    %c0_45 = arith.constant 0 : index
    %57 = vector.load %arg7[%c0_44, %c0_45] : memref<128x128xf32, #tpu.memory_space<vmem>>, vector<128x128xf32>
    tpu.vector_store %arg7[%c0_44, %c0_45], %56 {strides = array<i32>} : memref<128x128xf32, #tpu.memory_space<vmem>>, vector<128x128xf32>,
    return
  }
}

</mosaic_0001>

<llo_original>
// kernel: tpu_custom_call.1
$region0: #{tpu_custom_call.1}
  #allocation0 [shape = 'u32[]', space=smem, size = 0x4, offset = 0x4, fixed_abs, tag = 'smem constant byte address 0x4 - core index']
  #allocation1 [shape = 'u32[144,128]{1,0:T(1,128)}', space=vmem, size = 0x12000, scoped, tag = 'internal scratch']
  %s0 = inlined_call_operand.vmem [shape: bf16[384,128], index: 0, kind: input, shape index: {}]
  %s1 = inlined_call_operand.vmem [shape: f32[384,1], index: 1, kind: input, shape index: {}]
  %s2 = inlined_call_operand.vmem [shape: bf16[3,128,128], index: 2, kind: input, shape index: {}]
  %s3 = inlined_call_operand.hbm [shape: f32[128,128], index: 3, kind: input, shape index: {}]
  %s4 = inlined_call_operand.hbm [shape: bf16[3,128,128], index: 4, kind: input, shape index: {}]
  %s5 = inlined_call_operand.hbm [shape: bf16[128,128], index: 5, kind: input, shape index: {}]
  %s6 = inlined_call_operand.vmem [shape: f32[1,128], index: 6, kind: input, shape index: {}]
  %s7 = inlined_call_operand.hbm [shape: f32[128,128], index: 7, kind: output, shape index: {}]
  %s8 = sld [smem:[#allocation0]]
  $region50: #{tpu_custom_call.1} parent=0
    _
  %s10 = ssub.s32 1, %s8
  %s11 = scalar_select 0, %s10, %s8
  $region1: #{tpu_custom_call.1} parent=0
    #allocation2 [shape = 'u8[65536]{0}', space=vmem, size = 0x10000, scoped, tag = 'input window, operand 3, single buffered']
    #allocation3 [shape = 's32[1]{0}', space=sflag, size = 0x4, scoped, tag = 'scoped memory for tpu_custom_call.1']
    #allocation4 [shape = 's32[1]{0}', space=sflag, size = 0x4, scoped, tag = 'scoped memory for tpu_custom_call.1']
    #allocation5 [shape = 'u8[98304]{0}', space=vmem, size = 0x18000, scoped, tag = 'input window, operand 4, single buffered']
    #allocation6 [shape = 's32[1]{0}', space=sflag, size = 0x4, scoped, tag = 'scoped memory for tpu_custom_call.1']
    #allocation7 [shape = 'u8[32768]{0}', space=vmem, size = 0x8000, scoped, tag = 'input window, operand 5, single buffered']
    #allocation8 [shape = 'u8[65536]{0}', space=vmem, size = 0x10000, scoped, tag = 'output window, operand 0, single buffered']
    %12 = vsyncpa [#allocation3], 0
    %13 = vsyncpa [#allocation6], 0
    %14 = vsyncpa [#allocation4], 0
    // Predicated region
    $region2: #{tpu_custom_call.1} parent=1 // pred_check
      _
    $region3: #{tpu_custom_call.1} parent=1 // pred_check_branch
      %16 = sbr.rel (0) target = $region5
    $region4: #{tpu_custom_call.1} parent=1 // pred_region
      _
    $region5: #{tpu_custom_call.1} parent=1 // pred_fallthru
      _
    // Predicated region
    $region6: #{tpu_custom_call.1} parent=1 // pred_check
      _
    $region7: #{tpu_custom_call.1} parent=1 // pred_check_branch
      %18 = sbr.rel (0) target = $region9
    $region8: #{tpu_custom_call.1} parent=1 // pred_region
      _
    $region9: #{tpu_custom_call.1} parent=1 // pred_fallthru
      _
    // Predicated region
    $region10: #{tpu_custom_call.1} parent=1 // pred_check
      _
    $region11: #{tpu_custom_call.1} parent=1 // pred_check_branch
      %20 = sbr.rel (0) target = $region13
    $region12: #{tpu_custom_call.1} parent=1 // pred_region
      _
    $region13: #{tpu_custom_call.1} parent=1 // pred_fallthru
      _
    // Predicated region
    $region14: #{tpu_custom_call.1} parent=1 // pred_check
      _
    $region15: #{tpu_custom_call.1} parent=1 // pred_check_branch
      %22 = sbr.rel (0) target = $region17
    $region16: #{tpu_custom_call.1} parent=1 // pred_region
      %s24 = ssub.s32 2048, 2048
      %25 = vsyncadd [#allocation3], %s24
      %s26 = sshll.u32 [#allocation2], 4
      %s27 = int_to_ptr.vmem [resolvable:$true] %s26
      %32 = dma.hbm_to_vmem [thread:$0]  %s3, 2048, %s27, [#allocation3], 128, 128, 8
    $region17: #{tpu_custom_call.1} parent=1 // pred_fallthru
      _
    // Predicated region
    $region18: #{tpu_custom_call.1} parent=1 // pred_check
      _
    $region19: #{tpu_custom_call.1} parent=1 // pred_check_branch
      %34 = sbr.rel (0) target = $region21
    $region20: #{tpu_custom_call.1} parent=1 // pred_region
      %s36 = ssub.s32 3072, 3072
      %37 = vsyncadd [#allocation6], %s36
      %s38 = sshll.u32 [#allocation5], 4
      %s39 = int_to_ptr.vmem [resolvable:$true] %s38
      %44 = dma.hbm_to_vmem [thread:$0]  %s4, 3072, %s39, [#allocation6], 64, 64, 4
    $region21: #{tpu_custom_call.1} parent=1 // pred_fallthru
      _
    // Predicated region
    $region22: #{tpu_custom_call.1} parent=1 // pred_check
      _
    $region23: #{tpu_custom_call.1} parent=1 // pred_check_branch
      %46 = sbr.rel (0) target = $region25
    $region24: #{tpu_custom_call.1} parent=1 // pred_region
      %s48 = ssub.s32 1024, 1024
      %49 = vsyncadd [#allocation6], %s48
      %s50 = sshll.u32 [#allocation7], 4
      %s51 = int_to_ptr.vmem [resolvable:$true] %s50
      %56 = dma.hbm_to_vmem [thread:$0]  %s5, 1024, %s51, [#allocation6], 64, 64, 4
    $region25: #{tpu_custom_call.1} parent=1 // pred_fallthru
      _
    // Predicated region
    $region26: #{tpu_custom_call.1} parent=1 // pred_check
      _
    $region27: #{tpu_custom_call.1} parent=1 // pred_check_branch
      %58 = sbr.rel (0) target = $region29
    $region28: #{tpu_custom_call.1} parent=1 // pred_region
      _
    $region29: #{tpu_custom_call.1} parent=1 // pred_fallthru
      _
    // Predicated region
    $region30: #{tpu_custom_call.1} parent=1 // pred_check
      _
    $region31: #{tpu_custom_call.1} parent=1 // pred_check_branch
      %60 = sbr.rel (0) target = $region33
    $region32: #{tpu_custom_call.1} parent=1 // pred_region
      %61 = dma.done [#allocation3], 2048
    $region33: #{tpu_custom_call.1} parent=1 // pred_fallthru
      _
    // Predicated region
    $region34: #{tpu_custom_call.1} parent=1 // pred_check
      _
    $region35: #{tpu_custom_call.1} parent=1 // pred_check_branch
      %63 = sbr.rel (0) target = $region37
    $region36: #{tpu_custom_call.1} parent=1 // pred_region
      %64 = dma.done [#allocation6], 3072
    $region37: #{tpu_custom_call.1} parent=1 // pred_fallthru
      _
    // Predicated region
    $region38: #{tpu_custom_call.1} parent=1 // pred_check
      _
    $region39: #{tpu_custom_call.1} parent=1 // pred_check_branch
      %66 = sbr.rel (0) target = $region41
    $region40: #{tpu_custom_call.1} parent=1 // pred_region
      %67 = dma.done [#allocation6], 1024
    $region41: #{tpu_custom_call.1} parent=1 // pred_fallthru
      _
    %v69 = vld [vmem:[#allocation2] sm:$0xff]
    %v70 = vld [vmem:[#allocation2 + $0x8] sm:$0xff]
    %v71 = vld [vmem:[#allocation2 + $0x10] sm:$0xff]
    %v72 = vld [vmem:[#allocation2 + $0x18] sm:$0xff]
    %v73 = vld [vmem:[#allocation2 + $0x20] sm:$0xff]
    %v74 = vld [vmem:[#allocation2 + $0x28] sm:$0xff]
    %v75 = vld [vmem:[#allocation2 + $0x30] sm:$0xff]
    %v76 = vld [vmem:[#allocation2 + $0x38] sm:$0xff]
    %v77 = vld [vmem:[#allocation2 + $0x40] sm:$0xff]
    %v78 = vld [vmem:[#allocation2 + $0x48] sm:$0xff]
    %v79 = vld [vmem:[#allocation2 + $0x50] sm:$0xff]
    %v80 = vld [vmem:[#allocation2 + $0x58] sm:$0xff]
    %v81 = vld [vmem:[#allocation2 + $0x60] sm:$0xff]
    %v82 = vld [vmem:[#allocation2 + $0x68] sm:$0xff]
    %v83 = vld [vmem:[#allocation2 + $0x70] sm:$0xff]
    %v84 = vld [vmem:[#allocation2 + $0x78] sm:$0xff]
    %v85 = vld [vmem:[%s0] sm:$0xf]
    %v86 = vld [vmem:[%s0 + $0x4] sm:$0xf]
    %v87 = vld [vmem:[%s0 + $0x8] sm:$0xf]
    %v88 = vld [vmem:[%s0 + $0xc] sm:$0xf]
    %v89 = vld [vmem:[%s0 + $0x10] sm:$0xf]
    %v90 = vld [vmem:[%s0 + $0x14] sm:$0xf]
    %v91 = vld [vmem:[%s0 + $0x18] sm:$0xf]
    %v92 = vld [vmem:[%s0 + $0x1c] sm:$0xf]
    %v93 = vld [vmem:[%s0 + $0x20] sm:$0xf]
    %v94 = vld [vmem:[%s0 + $0x24] sm:$0xf]
    %v95 = vld [vmem:[%s0 + $0x28] sm:$0xf]
    %v96 = vld [vmem:[%s0 + $0x2c] sm:$0xf]
    %v97 = vld [vmem:[%s0 + $0x30] sm:$0xf]
    %v98 = vld [vmem:[%s0 + $0x34] sm:$0xf]
    %v99 = vld [vmem:[%s0 + $0x38] sm:$0xf]
    %v100 = vld [vmem:[%s0 + $0x3c] sm:$0xf]
    %v101 = vld [vmem:[%s2] sm:$0xf]
    %v102 = vld [vmem:[%s2 + $0x4] sm:$0xf]
    %v103 = vld [vmem:[%s2 + $0x8] sm:$0xf]
    %v104 = vld [vmem:[%s2 + $0xc] sm:$0xf]
    %v105 = vld [vmem:[%s2 + $0x10] sm:$0xf]
    %v106 = vld [vmem:[%s2 + $0x14] sm:$0xf]
    %v107 = vld [vmem:[%s2 + $0x18] sm:$0xf]
    %v108 = vld [vmem:[%s2 + $0x1c] sm:$0xf]
    %v109 = vld [vmem:[%s2 + $0x20] sm:$0xf]
    %v110 = vld [vmem:[%s2 + $0x24] sm:$0xf]
    %v111 = vld [vmem:[%s2 + $0x28] sm:$0xf]
    %v112 = vld [vmem:[%s2 + $0x2c] sm:$0xf]
    %v113 = vld [vmem:[%s2 + $0x30] sm:$0xf]
    %v114 = vld [vmem:[%s2 + $0x34] sm:$0xf]
    %v115 = vld [vmem:[%s2 + $0x38] sm:$0xf]
    %v116 = vld [vmem:[%s2 + $0x3c] sm:$0xf]
    %v133 = vunpack.c.l.b16 %v85
    %v134 = vunpack.c.l.b16 %v86
    %v135 = vunpack.c.l.b16 %v87
    %v136 = vunpack.c.l.b16 %v88
    %v137 = vunpack.c.l.b16 %v89
    %v138 = vunpack.c.l.b16 %v90
    %v139 = vunpack.c.l.b16 %v91
    %v140 = vunpack.c.l.b16 %v92
    %v141 = vunpack.c.l.b16 %v93
    %v142 = vunpack.c.l.b16 %v94
    %v143 = vunpack.c.l.b16 %v95
    %v144 = vunpack.c.l.b16 %v96
    %v145 = vunpack.c.l.b16 %v97
    %v146 = vunpack.c.l.b16 %v98
    %v147 = vunpack.c.l.b16 %v99
    %v148 = vunpack.c.l.b16 %v100
    %v149 = vpack.c.b16 %v134, %v133
    %v150 = vpack.c.b16 %v136, %v135
    %v151 = vpack.c.b16 %v138, %v137
    %v152 = vpack.c.b16 %v140, %v139
    %v153 = vpack.c.b16 %v142, %v141
    %v154 = vpack.c.b16 %v144, %v143
    %v155 = vpack.c.b16 %v146, %v145
    %v156 = vpack.c.b16 %v148, %v147
    %v181 = vunpack.c.l.b16 %v101
    %v182 = vunpack.c.l.b16 %v102
    %v183 = vunpack.c.l.b16 %v103
    %v184 = vunpack.c.l.b16 %v104
    %v185 = vunpack.c.l.b16 %v105
    %v186 = vunpack.c.l.b16 %v106
    %v187 = vunpack.c.l.b16 %v107
    %v188 = vunpack.c.l.b16 %v108
    %v189 = vunpack.c.l.b16 %v109
    %v190 = vunpack.c.l.b16 %v110
    %v191 = vunpack.c.l.b16 %v111
    %v192 = vunpack.c.l.b16 %v112
    %v193 = vunpack.c.l.b16 %v113
    %v194 = vunpack.c.l.b16 %v114
    %v195 = vunpack.c.l.b16 %v115
    %v196 = vunpack.c.l.b16 %v116
    %v197 = vpack.c.b16 %v182, %v181
    %v198 = vpack.c.b16 %v184, %v183
    %v199 = vpack.c.b16 %v186, %v185
    %v200 = vpack.c.b16 %v188, %v187
    %v201 = vpack.c.b16 %v190, %v189
    %v202 = vpack.c.b16 %v192, %v191
    %v203 = vpack.c.b16 %v194, %v193
    %v204 = vpack.c.b16 %v196, %v195
    %213 = vmatprep.subr.bf16.mxu0 0
    %214 = vmatpush1.bf16.msra.mxu0 %v204
    %215 = vmatprep.subr.bf16.mxu0 0
    %216 = vmatpush1.bf16.msra.mxu0 %v203
    %217 = vmatprep.subr.bf16.mxu0 0
    %218 = vmatpush1.bf16.msra.mxu0 %v202
    %219 = vmatprep.subr.bf16.mxu0 0
    %220 = vmatpush1.bf16.msra.mxu0 %v201
    %221 = vmatprep.subr.bf16.mxu0 0
    %222 = vmatpush1.bf16.msra.mxu0 %v200
    %223 = vmatprep.subr.bf16.mxu0 0
    %224 = vmatpush1.bf16.msra.mxu0 %v199
    %225 = vmatprep.subr.bf16.mxu0 0
    %226 = vmatpush1.bf16.msra.mxu0 %v198
    %227 = vmatprep.subr.bf16.mxu0 0
    %228 = vmatpush1.bf16.msra.mxu0 %v197
    %229 = vmatprep.subr.bf16.mxu0 0
    %230 = vmatpush2.bf16.msra.mxu0 0
    %231 = vmatprep.subr.bf16.mxu0 0
    %232 = vmatpush2.bf16.msra.mxu0 0
    %233 = vmatprep.subr.bf16.mxu0 0
    %234 = vmatpush2.bf16.msra.mxu0 0
    %235 = vmatprep.subr.bf16.mxu0 0
    %236 = vmatpush2.bf16.msra.mxu0 0
    %237 = vmatprep.subr.bf16.mxu0 0
    %238 = vmatpush2.bf16.msra.mxu0 0
    %239 = vmatprep.subr.bf16.mxu0 0
    %240 = vmatpush2.bf16.msra.mxu0 0
    %241 = vmatprep.subr.bf16.mxu0 0
    %242 = vmatpush2.bf16.msra.mxu0 0
    %243 = vmatprep.subr.bf16.mxu0 0
    %244 = vmatpush2.bf16.msra.mxu0 0
    %245 = vmatprep.mubr.bf16.mxu0 0
    %246 = vmatmul.mubr.bf16.gmra.mxu0 %v149
    %v247 = vpop.f32.mrf.mxu0
    %v248 = vadd.f32 0.0, %v247
    %v249 = vpop.f32.mrf.mxu0
    %v250 = vpop.f32.mrf.mxu0
    %v251 = vadd.f32 0.0, %v250
    %v252 = vpop.f32.mrf.mxu0
    %253 = vmatprep.mubr.bf16.mxu0 0
    %254 = vmatmul.mubr.bf16.gmra.mxu0 %v150
    %v255 = vpop.f32.mrf.mxu0
    %v256 = vadd.f32 0.0, %v255
    %v257 = vpop.f32.mrf.mxu0
    %v258 = vpop.f32.mrf.mxu0
    %v259 = vadd.f32 0.0, %v258
    %v260 = vpop.f32.mrf.mxu0
    %261 = vmatprep.mubr.bf16.mxu0 0
    %262 = vmatmul.mubr.bf16.gmra.mxu0 %v151
    %v263 = vpop.f32.mrf.mxu0
    %v264 = vadd.f32 0.0, %v263
    %v265 = vpop.f32.mrf.mxu0
    %v266 = vpop.f32.mrf.mxu0
    %v267 = vadd.f32 0.0, %v266
    %v268 = vpop.f32.mrf.mxu0
    %269 = vmatprep.mubr.bf16.mxu0 0
    %270 = vmatmul.mubr.bf16.gmra.mxu0 %v152
    %v271 = vpop.f32.mrf.mxu0
    %v272 = vadd.f32 0.0, %v271
    %v273 = vpop.f32.mrf.mxu0
    %v274 = vpop.f32.mrf.mxu0
    %v275 = vadd.f32 0.0, %v274
    %v276 = vpop.f32.mrf.mxu0
    %277 = vmatprep.mubr.bf16.mxu0 0
    %278 = vmatmul.mubr.bf16.gmra.mxu0 %v153
    %v279 = vpop.f32.mrf.mxu0
    %v280 = vadd.f32 0.0, %v279
    %v281 = vpop.f32.mrf.mxu0
    %v282 = vpop.f32.mrf.mxu0
    %v283 = vadd.f32 0.0, %v282
    %v284 = vpop.f32.mrf.mxu0
    %285 = vmatprep.mubr.bf16.mxu0 0
    %286 = vmatmul.mubr.bf16.gmra.mxu0 %v154
    %v287 = vpop.f32.mrf.mxu0
    %v288 = vadd.f32 0.0, %v287
    %v289 = vpop.f32.mrf.mxu0
    %v290 = vpop.f32.mrf.mxu0
    %v291 = vadd.f32 0.0, %v290
    %v292 = vpop.f32.mrf.mxu0
    %293 = vmatprep.mubr.bf16.mxu0 0
    %294 = vmatmul.mubr.bf16.gmra.mxu0 %v155
    %v295 = vpop.f32.mrf.mxu0
    %v296 = vadd.f32 0.0, %v295
    %v297 = vpop.f32.mrf.mxu0
    %v298 = vpop.f32.mrf.mxu0
    %v299 = vadd.f32 0.0, %v298
    %v300 = vpop.f32.mrf.mxu0
    %301 = vmatprep.mubr.bf16.mxu0 0
    %302 = vmatmul.mubr.bf16.gmra.mxu0 %v156
    %v303 = vpop.f32.mrf.mxu0
    %v304 = vadd.f32 0.0, %v303
    %v305 = vpop.f32.mrf.mxu0
    %v306 = vpop.f32.mrf.mxu0
    %v307 = vadd.f32 0.0, %v306
    %v308 = vpop.f32.mrf.mxu0
    %309 = vdwg.mxu0
    %v310 = vld [vmem:[%s1] sm:$0xff]
    %v311 = vld [vmem:[%s1 + $0x8] sm:$0xff]
    %v312 = vld [vmem:[%s1 + $0x10] sm:$0xff]
    %v313 = vld [vmem:[%s1 + $0x18] sm:$0xff]
    %v314 = vld [vmem:[%s1 + $0x20] sm:$0xff]
    %v315 = vld [vmem:[%s1 + $0x28] sm:$0xff]
    %v316 = vld [vmem:[%s1 + $0x30] sm:$0xff]
    %v317 = vld [vmem:[%s1 + $0x38] sm:$0xff]
    %v318 = vld [vmem:[%s1 + $0x40] sm:$0xff]
    %v319 = vld [vmem:[%s1 + $0x48] sm:$0xff]
    %v320 = vld [vmem:[%s1 + $0x50] sm:$0xff]
    %v321 = vld [vmem:[%s1 + $0x58] sm:$0xff]
    %v322 = vld [vmem:[%s1 + $0x60] sm:$0xff]
    %v323 = vld [vmem:[%s1 + $0x68] sm:$0xff]
    %v324 = vld [vmem:[%s1 + $0x70] sm:$0xff]
    %v325 = vld [vmem:[%s1 + $0x78] sm:$0xff]
    %327 = vset.pattern.permute.xlu0 0
    %328 = vperm.xlu0 %327, %v310
    %v329 = vpop.permute.xlu0 %328
    %332 = vset.pattern.permute.xlu0 0
    %333 = vperm.xlu0 %332, %v311
    %v334 = vpop.permute.xlu0 %333
    %337 = vset.pattern.permute.xlu0 0
    %338 = vperm.xlu0 %337, %v312
    %v339 = vpop.permute.xlu0 %338
    %342 = vset.pattern.permute.xlu0 0
    %343 = vperm.xlu0 %342, %v313
    %v344 = vpop.permute.xlu0 %343
    %347 = vset.pattern.permute.xlu0 0
    %348 = vperm.xlu0 %347, %v314
    %v349 = vpop.permute.xlu0 %348
    %352 = vset.pattern.permute.xlu0 0
    %353 = vperm.xlu0 %352, %v315
    %v354 = vpop.permute.xlu0 %353
    %357 = vset.pattern.permute.xlu0 0
    %358 = vperm.xlu0 %357, %v316
    %v359 = vpop.permute.xlu0 %358
    %362 = vset.pattern.permute.xlu0 0
    %363 = vperm.xlu0 %362, %v317
    %v364 = vpop.permute.xlu0 %363
    %367 = vset.pattern.permute.xlu0 0
    %368 = vperm.xlu0 %367, %v318
    %v369 = vpop.permute.xlu0 %368
    %372 = vset.pattern.permute.xlu0 0
    %373 = vperm.xlu0 %372, %v319
    %v374 = vpop.permute.xlu0 %373
    %377 = vset.pattern.permute.xlu0 0
    %378 = vperm.xlu0 %377, %v320
    %v379 = vpop.permute.xlu0 %378
    %382 = vset.pattern.permute.xlu0 0
    %383 = vperm.xlu0 %382, %v321
    %v384 = vpop.permute.xlu0 %383
    %387 = vset.pattern.permute.xlu0 0
    %388 = vperm.xlu0 %387, %v322
    %v389 = vpop.permute.xlu0 %388
    %392 = vset.pattern.permute.xlu0 0
    %393 = vperm.xlu0 %392, %v323
    %v394 = vpop.permute.xlu0 %393
    %397 = vset.pattern.permute.xlu0 0
    %398 = vperm.xlu0 %397, %v324
    %v399 = vpop.permute.xlu0 %398
    %402 = vset.pattern.permute.xlu0 0
    %403 = vperm.xlu0 %402, %v325
    %v404 = vpop.permute.xlu0 %403
    %v406 = vmul.f32 %v329, %v248
    %v407 = vmul.f32 %v334, %v251
    %v408 = vmul.f32 %v339, %v256
    %v409 = vmul.f32 %v344, %v259
    %v410 = vmul.f32 %v349, %v264
    %v411 = vmul.f32 %v354, %v267
    %v412 = vmul.f32 %v359, %v272
    %v413 = vmul.f32 %v364, %v275
    %v414 = vmul.f32 %v369, %v280
    %v415 = vmul.f32 %v374, %v283
    %v416 = vmul.f32 %v379, %v288
    %v417 = vmul.f32 %v384, %v291
    %v418 = vmul.f32 %v389, %v296
    %v419 = vmul.f32 %v394, %v299
    %v420 = vmul.f32 %v399, %v304
    %v421 = vmul.f32 %v404, %v307
    %v422 = vadd.f32 %v69, %v406
    %v423 = vadd.f32 %v70, %v407
    %v424 = vadd.f32 %v71, %v408
    %v425 = vadd.f32 %v72, %v409
    %v426 = vadd.f32 %v73, %v410
    %v427 = vadd.f32 %v74, %v411
    %v428 = vadd.f32 %v75, %v412
    %v429 = vadd.f32 %v76, %v413
    %v430 = vadd.f32 %v77, %v414
    %v431 = vadd.f32 %v78, %v415
    %v432 = vadd.f32 %v79, %v416
    %v433 = vadd.f32 %v80, %v417
    %v434 = vadd.f32 %v81, %v418
    %v435 = vadd.f32 %v82, %v419
    %v436 = vadd.f32 %v83, %v420
    %v437 = vadd.f32 %v84, %v421
    %v438 = vld [vmem:[%s0 + $0x40] sm:$0xf]
    %v439 = vld [vmem:[%s0 + $0x44] sm:$0xf]
    %v440 = vld [vmem:[%s0 + $0x48] sm:$0xf]
    %v441 = vld [vmem:[%s0 + $0x4c] sm:$0xf]
    %v442 = vld [vmem:[%s0 + $0x50] sm:$0xf]
    %v443 = vld [vmem:[%s0 + $0x54] sm:$0xf]
    %v444 = vld [vmem:[%s0 + $0x58] sm:$0xf]
    %v445 = vld [vmem:[%s0 + $0x5c] sm:$0xf]
    %v446 = vld [vmem:[%s0 + $0x60] sm:$0xf]
    %v447 = vld [vmem:[%s0 + $0x64] sm:$0xf]
    %v448 = vld [vmem:[%s0 + $0x68] sm:$0xf]
    %v449 = vld [vmem:[%s0 + $0x6c] sm:$0xf]
    %v450 = vld [vmem:[%s0 + $0x70] sm:$0xf]
    %v451 = vld [vmem:[%s0 + $0x74] sm:$0xf]
    %v452 = vld [vmem:[%s0 + $0x78] sm:$0xf]
    %v453 = vld [vmem:[%s0 + $0x7c] sm:$0xf]
    %s454 = scalar_lea.vmem %s2, 64
    %v455 = vld [vmem:[%s454] sm:$0xf]
    %v456 = vld [vmem:[%s454 + $0x4] sm:$0xf]
    %v457 = vld [vmem:[%s454 + $0x8] sm:$0xf]
    %v458 = vld [vmem:[%s454 + $0xc] sm:$0xf]
    %v459 = vld [vmem:[%s454 + $0x10] sm:$0xf]
    %v460 = vld [vmem:[%s454 + $0x14] sm:$0xf]
    %v461 = vld [vmem:[%s454 + $0x18] sm:$0xf]
    %v462 = vld [vmem:[%s454 + $0x1c] sm:$0xf]
    %v463 = vld [vmem:[%s454 + $0x20] sm:$0xf]
    %v464 = vld [vmem:[%s454 + $0x24] sm:$0xf]
    %v465 = vld [vmem:[%s454 + $0x28] sm:$0xf]
    %v466 = vld [vmem:[%s454 + $0x2c] sm:$0xf]
    %v467 = vld [vmem:[%s454 + $0x30] sm:$0xf]
    %v468 = vld [vmem:[%s454 + $0x34] sm:$0xf]
    %v469 = vld [vmem:[%s454 + $0x38] sm:$0xf]
    %v470 = vld [vmem:[%s454 + $0x3c] sm:$0xf]
    %v487 = vunpack.c.l.b16 %v438
    %v488 = vunpack.c.l.b16 %v439
    %v489 = vunpack.c.l.b16 %v440
    %v490 = vunpack.c.l.b16 %v441
    %v491 = vunpack.c.l.b16 %v442
    %v492 = vunpack.c.l.b16 %v443
    %v493 = vunpack.c.l.b16 %v444
    %v494 = vunpack.c.l.b16 %v445
    %v495 = vunpack.c.l.b16 %v446
    %v496 = vunpack.c.l.b16 %v447
    %v497 = vunpack.c.l.b16 %v448
    %v498 = vunpack.c.l.b16 %v449
    %v499 = vunpack.c.l.b16 %v450
    %v500 = vunpack.c.l.b16 %v451
    %v501 = vunpack.c.l.b16 %v452
    %v502 = vunpack.c.l.b16 %v453
    %v503 = vpack.c.b16 %v488, %v487
    %v504 = vpack.c.b16 %v490, %v489
    %v505 = vpack.c.b16 %v492, %v491
    %v506 = vpack.c.b16 %v494, %v493
    %v507 = vpack.c.b16 %v496, %v495
    %v508 = vpack.c.b16 %v498, %v497
    %v509 = vpack.c.b16 %v500, %v499
    %v510 = vpack.c.b16 %v502, %v501
    %v535 = vunpack.c.l.b16 %v455
    %v536 = vunpack.c.l.b16 %v456
    %v537 = vunpack.c.l.b16 %v457
    %v538 = vunpack.c.l.b16 %v458
    %v539 = vunpack.c.l.b16 %v459
    %v540 = vunpack.c.l.b16 %v460
    %v541 = vunpack.c.l.b16 %v461
    %v542 = vunpack.c.l.b16 %v462
    %v543 = vunpack.c.l.b16 %v463
    %v544 = vunpack.c.l.b16 %v464
    %v545 = vunpack.c.l.b16 %v465
    %v546 = vunpack.c.l.b16 %v466
    %v547 = vunpack.c.l.b16 %v467
    %v548 = vunpack.c.l.b16 %v468
    %v549 = vunpack.c.l.b16 %v469
    %v550 = vunpack.c.l.b16 %v470
    %v551 = vpack.c.b16 %v536, %v535
    %v552 = vpack.c.b16 %v538, %v537
    %v553 = vpack.c.b16 %v540, %v539
    %v554 = vpack.c.b16 %v542, %v541
    %v555 = vpack.c.b16 %v544, %v543
    %v556 = vpack.c.b16 %v546, %v545
    %v557 = vpack.c.b16 %v548, %v547
    %v558 = vpack.c.b16 %v550, %v549
    %567 = vmatprep.subr.bf16.mxu0 0
    %568 = vmatpush1.bf16.msra.mxu0 %v558
    %569 = vmatprep.subr.bf16.mxu0 0
    %570 = vmatpush1.bf16.msra.mxu0 %v557
    %571 = vmatprep.subr.bf16.mxu0 0
    %572 = vmatpush1.bf16.msra.mxu0 %v556
    %573 = vmatprep.subr.bf16.mxu0 0
    %574 = vmatpush1.bf16.msra.mxu0 %v555
    %575 = vmatprep.subr.bf16.mxu0 0
    %576 = vmatpush1.bf16.msra.mxu0 %v554
    %577 = vmatprep.subr.bf16.mxu0 0
    %578 = vmatpush1.bf16.msra.mxu0 %v553
    %579 = vmatprep.subr.bf16.mxu0 0
    %580 = vmatpush1.bf16.msra.mxu0 %v552
    %581 = vmatprep.subr.bf16.mxu0 0
    %582 = vmatpush1.bf16.msra.mxu0 %v551
    %583 = vmatprep.subr.bf16.mxu0 0
    %584 = vmatpush2.bf16.msra.mxu0 0
    %585 = vmatprep.subr.bf16.mxu0 0
    %586 = vmatpush2.bf16.msra.mxu0 0
    %587 = vmatprep.subr.bf16.mxu0 0
    %588 = vmatpush2.bf16.msra.mxu0 0
    %589 = vmatprep.subr.bf16.mxu0 0
    %590 = vmatpush2.bf16.msra.mxu0 0
    %591 = vmatprep.subr.bf16.mxu0 0
    %592 = vmatpush2.bf16.msra.mxu0 0
    %593 = vmatprep.subr.bf16.mxu0 0
    %594 = vmatpush2.bf16.msra.mxu0 0
    %595 = vmatprep.subr.bf16.mxu0 0
    %596 = vmatpush2.bf16.msra.mxu0 0
    %597 = vmatprep.subr.bf16.mxu0 0
    %598 = vmatpush2.bf16.msra.mxu0 0
    %599 = vmatprep.mubr.bf16.mxu0 0
    %600 = vmatmul.mubr.bf16.gmra.mxu0 %v503
    %v601 = vpop.f32.mrf.mxu0
    %v602 = vadd.f32 0.0, %v601
    %v603 = vpop.f32.mrf.mxu0
    %v604 = vpop.f32.mrf.mxu0
    %v605 = vadd.f32 0.0, %v604
    %v606 = vpop.f32.mrf.mxu0
    %607 = vmatprep.mubr.bf16.mxu0 0
    %608 = vmatmul.mubr.bf16.gmra.mxu0 %v504
    %v609 = vpop.f32.mrf.mxu0
    %v610 = vadd.f32 0.0, %v609
    %v611 = vpop.f32.mrf.mxu0
    %v612 = vpop.f32.mrf.mxu0
    %v613 = vadd.f32 0.0, %v612
    %v614 = vpop.f32.mrf.mxu0
    %615 = vmatprep.mubr.bf16.mxu0 0
    %616 = vmatmul.mubr.bf16.gmra.mxu0 %v505
    %v617 = vpop.f32.mrf.mxu0
    %v618 = vadd.f32 0.0, %v617
    %v619 = vpop.f32.mrf.mxu0
    %v620 = vpop.f32.mrf.mxu0
    %v621 = vadd.f32 0.0, %v620
    %v622 = vpop.f32.mrf.mxu0
    %623 = vmatprep.mubr.bf16.mxu0 0
    %624 = vmatmul.mubr.bf16.gmra.mxu0 %v506
    %v625 = vpop.f32.mrf.mxu0
    %v626 = vadd.f32 0.0, %v625
    %v627 = vpop.f32.mrf.mxu0
    %v628 = vpop.f32.mrf.mxu0
    %v629 = vadd.f32 0.0, %v628
    %v630 = vpop.f32.mrf.mxu0
    %631 = vmatprep.mubr.bf16.mxu0 0
    %632 = vmatmul.mubr.bf16.gmra.mxu0 %v507
    %v633 = vpop.f32.mrf.mxu0
    %v634 = vadd.f32 0.0, %v633
    %v635 = vpop.f32.mrf.mxu0
    %v636 = vpop.f32.mrf.mxu0
    %v637 = vadd.f32 0.0, %v636
    %v638 = vpop.f32.mrf.mxu0
    %639 = vmatprep.mubr.bf16.mxu0 0
    %640 = vmatmul.mubr.bf16.gmra.mxu0 %v508
    %v641 = vpop.f32.mrf.mxu0
    %v642 = vadd.f32 0.0, %v641
    %v643 = vpop.f32.mrf.mxu0
    %v644 = vpop.f32.mrf.mxu0
    %v645 = vadd.f32 0.0, %v644
    %v646 = vpop.f32.mrf.mxu0
    %647 = vmatprep.mubr.bf16.mxu0 0
    %648 = vmatmul.mubr.bf16.gmra.mxu0 %v509
    %v649 = vpop.f32.mrf.mxu0
    %v650 = vadd.f32 0.0, %v649
    %v651 = vpop.f32.mrf.mxu0
    %v652 = vpop.f32.mrf.mxu0
    %v653 = vadd.f32 0.0, %v652
    %v654 = vpop.f32.mrf.mxu0
    %655 = vmatprep.mubr.bf16.mxu0 0
    %656 = vmatmul.mubr.bf16.gmra.mxu0 %v510
    %v657 = vpop.f32.mrf.mxu0
    %v658 = vadd.f32 0.0, %v657
    %v659 = vpop.f32.mrf.mxu0
    %v660 = vpop.f32.mrf.mxu0
    %v661 = vadd.f32 0.0, %v660
    %v662 = vpop.f32.mrf.mxu0
    %663 = vdwg.mxu0
    %v664 = vld [vmem:[%s1 + $0x80] sm:$0xff]
    %v665 = vld [vmem:[%s1 + $0x88] sm:$0xff]
    %v666 = vld [vmem:[%s1 + $0x90] sm:$0xff]
    %v667 = vld [vmem:[%s1 + $0x98] sm:$0xff]
    %v668 = vld [vmem:[%s1 + $0xa0] sm:$0xff]
    %v669 = vld [vmem:[%s1 + $0xa8] sm:$0xff]
    %v670 = vld [vmem:[%s1 + $0xb0] sm:$0xff]
    %v671 = vld [vmem:[%s1 + $0xb8] sm:$0xff]
    %v672 = vld [vmem:[%s1 + $0xc0] sm:$0xff]
    %v673 = vld [vmem:[%s1 + $0xc8] sm:$0xff]
    %v674 = vld [vmem:[%s1 + $0xd0] sm:$0xff]
    %v675 = vld [vmem:[%s1 + $0xd8] sm:$0xff]
    %v676 = vld [vmem:[%s1 + $0xe0] sm:$0xff]
    %v677 = vld [vmem:[%s1 + $0xe8] sm:$0xff]
    %v678 = vld [vmem:[%s1 + $0xf0] sm:$0xff]
    %v679 = vld [vmem:[%s1 + $0xf8] sm:$0xff]
    %681 = vset.pattern.permute.xlu0 0
    %682 = vperm.xlu0 %681, %v664
    %v683 = vpop.permute.xlu0 %682
    %686 = vset.pattern.permute.xlu0 0
    %687 = vperm.xlu0 %686, %v665
    %v688 = vpop.permute.xlu0 %687
    %691 = vset.pattern.permute.xlu0 0
    %692 = vperm.xlu0 %691, %v666
    %v693 = vpop.permute.xlu0 %692
    %696 = vset.pattern.permute.xlu0 0
    %697 = vperm.xlu0 %696, %v667
    %v698 = vpop.permute.xlu0 %697
    %701 = vset.pattern.permute.xlu0 0
    %702 = vperm.xlu0 %701, %v668
    %v703 = vpop.permute.xlu0 %702
    %706 = vset.pattern.permute.xlu0 0
    %707 = vperm.xlu0 %706, %v669
    %v708 = vpop.permute.xlu0 %707
    %711 = vset.pattern.permute.xlu0 0
    %712 = vperm.xlu0 %711, %v670
    %v713 = vpop.permute.xlu0 %712
    %716 = vset.pattern.permute.xlu0 0
    %717 = vperm.xlu0 %716, %v671
    %v718 = vpop.permute.xlu0 %717
    %721 = vset.pattern.permute.xlu0 0
    %722 = vperm.xlu0 %721, %v672
    %v723 = vpop.permute.xlu0 %722
    %726 = vset.pattern.permute.xlu0 0
    %727 = vperm.xlu0 %726, %v673
    %v728 = vpop.permute.xlu0 %727
    %731 = vset.pattern.permute.xlu0 0
    %732 = vperm.xlu0 %731, %v674
    %v733 = vpop.permute.xlu0 %732
    %736 = vset.pattern.permute.xlu0 0
    %737 = vperm.xlu0 %736, %v675
    %v738 = vpop.permute.xlu0 %737
    %741 = vset.pattern.permute.xlu0 0
    %742 = vperm.xlu0 %741, %v676
    %v743 = vpop.permute.xlu0 %742
    %746 = vset.pattern.permute.xlu0 0
    %747 = vperm.xlu0 %746, %v677
    %v748 = vpop.permute.xlu0 %747
    %751 = vset.pattern.permute.xlu0 0
    %752 = vperm.xlu0 %751, %v678
    %v753 = vpop.permute.xlu0 %752
    %756 = vset.pattern.permute.xlu0 0
    %757 = vperm.xlu0 %756, %v679
    %v758 = vpop.permute.xlu0 %757
    %v760 = vmul.f32 %v683, %v602
    %v761 = vmul.f32 %v688, %v605
    %v762 = vmul.f32 %v693, %v610
    %v763 = vmul.f32 %v698, %v613
    %v764 = vmul.f32 %v703, %v618
    %v765 = vmul.f32 %v708, %v621
    %v766 = vmul.f32 %v713, %v626
    %v767 = vmul.f32 %v718, %v629
    %v768 = vmul.f32 %v723, %v634
    %v769 = vmul.f32 %v728, %v637
    %v770 = vmul.f32 %v733, %v642
    %v771 = vmul.f32 %v738, %v645
    %v772 = vmul.f32 %v743, %v650
    %v773 = vmul.f32 %v748, %v653
    %v774 = vmul.f32 %v753, %v658
    %v775 = vmul.f32 %v758, %v661
    %v776 = vadd.f32 %v422, %v760
    %v777 = vadd.f32 %v423, %v761
    %v778 = vadd.f32 %v424, %v762
    %v779 = vadd.f32 %v425, %v763
    %v780 = vadd.f32 %v426, %v764
    %v781 = vadd.f32 %v427, %v765
    %v782 = vadd.f32 %v428, %v766
    %v783 = vadd.f32 %v429, %v767
    %v784 = vadd.f32 %v430, %v768
    %v785 = vadd.f32 %v431, %v769
    %v786 = vadd.f32 %v432, %v770
    %v787 = vadd.f32 %v433, %v771
    %v788 = vadd.f32 %v434, %v772
    %v789 = vadd.f32 %v435, %v773
    %v790 = vadd.f32 %v436, %v774
    %v791 = vadd.f32 %v437, %v775
    %v792 = vld [vmem:[%s0 + $0x80] sm:$0xf]
    %v793 = vld [vmem:[%s0 + $0x84] sm:$0xf]
    %v794 = vld [vmem:[%s0 + $0x88] sm:$0xf]
    %v795 = vld [vmem:[%s0 + $0x8c] sm:$0xf]
    %v796 = vld [vmem:[%s0 + $0x90] sm:$0xf]
    %v797 = vld [vmem:[%s0 + $0x94] sm:$0xf]
    %v798 = vld [vmem:[%s0 + $0x98] sm:$0xf]
    %v799 = vld [vmem:[%s0 + $0x9c] sm:$0xf]
    %v800 = vld [vmem:[%s0 + $0xa0] sm:$0xf]
    %v801 = vld [vmem:[%s0 + $0xa4] sm:$0xf]
    %v802 = vld [vmem:[%s0 + $0xa8] sm:$0xf]
    %v803 = vld [vmem:[%s0 + $0xac] sm:$0xf]
    %v804 = vld [vmem:[%s0 + $0xb0] sm:$0xf]
    %v805 = vld [vmem:[%s0 + $0xb4] sm:$0xf]
    %v806 = vld [vmem:[%s0 + $0xb8] sm:$0xf]
    %v807 = vld [vmem:[%s0 + $0xbc] sm:$0xf]
    %s808 = scalar_lea.vmem %s2, 128
    %v809 = vld [vmem:[%s808] sm:$0xf]
    %v810 = vld [vmem:[%s808 + $0x4] sm:$0xf]
    %v811 = vld [vmem:[%s808 + $0x8] sm:$0xf]
    %v812 = vld [vmem:[%s808 + $0xc] sm:$0xf]
    %v813 = vld [vmem:[%s808 + $0x10] sm:$0xf]
    %v814 = vld [vmem:[%s808 + $0x14] sm:$0xf]
    %v815 = vld [vmem:[%s808 + $0x18] sm:$0xf]
    %v816 = vld [vmem:[%s808 + $0x1c] sm:$0xf]
    %v817 = vld [vmem:[%s808 + $0x20] sm:$0xf]
    %v818 = vld [vmem:[%s808 + $0x24] sm:$0xf]
    %v819 = vld [vmem:[%s808 + $0x28] sm:$0xf]
    %v820 = vld [vmem:[%s808 + $0x2c] sm:$0xf]
    %v821 = vld [vmem:[%s808 + $0x30] sm:$0xf]
    %v822 = vld [vmem:[%s808 + $0x34] sm:$0xf]
    %v823 = vld [vmem:[%s808 + $0x38] sm:$0xf]
    %v824 = vld [vmem:[%s808 + $0x3c] sm:$0xf]
    %v841 = vunpack.c.l.b16 %v792
    %v842 = vunpack.c.l.b16 %v793
    %v843 = vunpack.c.l.b16 %v794
    %v844 = vunpack.c.l.b16 %v795
    %v845 = vunpack.c.l.b16 %v796
    %v846 = vunpack.c.l.b16 %v797
    %v847 = vunpack.c.l.b16 %v798
    %v848 = vunpack.c.l.b16 %v799
    %v849 = vunpack.c.l.b16 %v800
    %v850 = vunpack.c.l.b16 %v801
    %v851 = vunpack.c.l.b16 %v802
    %v852 = vunpack.c.l.b16 %v803
    %v853 = vunpack.c.l.b16 %v804
    %v854 = vunpack.c.l.b16 %v805
    %v855 = vunpack.c.l.b16 %v806
    %v856 = vunpack.c.l.b16 %v807
    %v857 = vpack.c.b16 %v842, %v841
    %v858 = vpack.c.b16 %v844, %v843
    %v859 = vpack.c.b16 %v846, %v845
    %v860 = vpack.c.b16 %v848, %v847
    %v861 = vpack.c.b16 %v850, %v849
    %v862 = vpack.c.b16 %v852, %v851
    %v863 = vpack.c.b16 %v854, %v853
    %v864 = vpack.c.b16 %v856, %v855
    %v889 = vunpack.c.l.b16 %v809
    %v890 = vunpack.c.l.b16 %v810
    %v891 = vunpack.c.l.b16 %v811
    %v892 = vunpack.c.l.b16 %v812
    %v893 = vunpack.c.l.b16 %v813
    %v894 = vunpack.c.l.b16 %v814
    %v895 = vunpack.c.l.b16 %v815
    %v896 = vunpack.c.l.b16 %v816
    %v897 = vunpack.c.l.b16 %v817
    %v898 = vunpack.c.l.b16 %v818
    %v899 = vunpack.c.l.b16 %v819
    %v900 = vunpack.c.l.b16 %v820
    %v901 = vunpack.c.l.b16 %v821
    %v902 = vunpack.c.l.b16 %v822
    %v903 = vunpack.c.l.b16 %v823
    %v904 = vunpack.c.l.b16 %v824
    %v905 = vpack.c.b16 %v890, %v889
    %v906 = vpack.c.b16 %v892, %v891
    %v907 = vpack.c.b16 %v894, %v893
    %v908 = vpack.c.b16 %v896, %v895
    %v909 = vpack.c.b16 %v898, %v897
    %v910 = vpack.c.b16 %v900, %v899
    %v911 = vpack.c.b16 %v902, %v901
    %v912 = vpack.c.b16 %v904, %v903
    %921 = vmatprep.subr.bf16.mxu0 0
    %922 = vmatpush1.bf16.msra.mxu0 %v912
    %923 = vmatprep.subr.bf16.mxu0 0
    %924 = vmatpush1.bf16.msra.mxu0 %v911
    %925 = vmatprep.subr.bf16.mxu0 0
    %926 = vmatpush1.bf16.msra.mxu0 %v910
    %927 = vmatprep.subr.bf16.mxu0 0
    %928 = vmatpush1.bf16.msra.mxu0 %v909
    %929 = vmatprep.subr.bf16.mxu0 0
    %930 = vmatpush1.bf16.msra.mxu0 %v908
    %931 = vmatprep.subr.bf16.mxu0 0
    %932 = vmatpush1.bf16.msra.mxu0 %v907
    %933 = vmatprep.subr.bf16.mxu0 0
    %934 = vmatpush1.bf16.msra.mxu0 %v906
    %935 = vmatprep.subr.bf16.mxu0 0
    %936 = vmatpush1.bf16.msra.mxu0 %v905
    %937 = vmatprep.subr.bf16.mxu0 0
    %938 = vmatpush2.bf16.msra.mxu0 0
    %939 = vmatprep.subr.bf16.mxu0 0
    %940 = vmatpush2.bf16.msra.mxu0 0
    %941 = vmatprep.subr.bf16.mxu0 0
    %942 = vmatpush2.bf16.msra.mxu0 0
    %943 = vmatprep.subr.bf16.mxu0 0
    %944 = vmatpush2.bf16.msra.mxu0 0
    %945 = vmatprep.subr.bf16.mxu0 0
    %946 = vmatpush2.bf16.msra.mxu0 0
    %947 = vmatprep.subr.bf16.mxu0 0
    %948 = vmatpush2.bf16.msra.mxu0 0
    %949 = vmatprep.subr.bf16.mxu0 0
    %950 = vmatpush2.bf16.msra.mxu0 0
    %951 = vmatprep.subr.bf16.mxu0 0
    %952 = vmatpush2.bf16.msra.mxu0 0
    %953 = vmatprep.mubr.bf16.mxu0 0
    %954 = vmatmul.mubr.bf16.gmra.mxu0 %v857
    %v955 = vpop.f32.mrf.mxu0
    %v956 = vadd.f32 0.0, %v955
    %v957 = vpop.f32.mrf.mxu0
    %v958 = vpop.f32.mrf.mxu0
    %v959 = vadd.f32 0.0, %v958
    %v960 = vpop.f32.mrf.mxu0
    %961 = vmatprep.mubr.bf16.mxu0 0
    %962 = vmatmul.mubr.bf16.gmra.mxu0 %v858
    %v963 = vpop.f32.mrf.mxu0
    %v964 = vadd.f32 0.0, %v963
    %v965 = vpop.f32.mrf.mxu0
    %v966 = vpop.f32.mrf.mxu0
    %v967 = vadd.f32 0.0, %v966
    %v968 = vpop.f32.mrf.mxu0
    %969 = vmatprep.mubr.bf16.mxu0 0
    %970 = vmatmul.mubr.bf16.gmra.mxu0 %v859
    %v971 = vpop.f32.mrf.mxu0
    %v972 = vadd.f32 0.0, %v971
    %v973 = vpop.f32.mrf.mxu0
    %v974 = vpop.f32.mrf.mxu0
    %v975 = vadd.f32 0.0, %v974
    %v976 = vpop.f32.mrf.mxu0
    %977 = vmatprep.mubr.bf16.mxu0 0
    %978 = vmatmul.mubr.bf16.gmra.mxu0 %v860
    %v979 = vpop.f32.mrf.mxu0
    %v980 = vadd.f32 0.0, %v979
    %v981 = vpop.f32.mrf.mxu0
    %v982 = vpop.f32.mrf.mxu0
    %v983 = vadd.f32 0.0, %v982
    %v984 = vpop.f32.mrf.mxu0
    %985 = vmatprep.mubr.bf16.mxu0 0
    %986 = vmatmul.mubr.bf16.gmra.mxu0 %v861
    %v987 = vpop.f32.mrf.mxu0
    %v988 = vadd.f32 0.0, %v987
    %v989 = vpop.f32.mrf.mxu0
    %v990 = vpop.f32.mrf.mxu0
    %v991 = vadd.f32 0.0, %v990
    %v992 = vpop.f32.mrf.mxu0
    %993 = vmatprep.mubr.bf16.mxu0 0
    %994 = vmatmul.mubr.bf16.gmra.mxu0 %v862
    %v995 = vpop.f32.mrf.mxu0
    %v996 = vadd.f32 0.0, %v995
    %v997 = vpop.f32.mrf.mxu0
    %v998 = vpop.f32.mrf.mxu0
    %v999 = vadd.f32 0.0, %v998
    %v1000 = vpop.f32.mrf.mxu0
    %1001 = vmatprep.mubr.bf16.mxu0 0
    %1002 = vmatmul.mubr.bf16.gmra.mxu0 %v863
    %v1003 = vpop.f32.mrf.mxu0
    %v1004 = vadd.f32 0.0, %v1003
    %v1005 = vpop.f32.mrf.mxu0
    %v1006 = vpop.f32.mrf.mxu0
    %v1007 = vadd.f32 0.0, %v1006
    %v1008 = vpop.f32.mrf.mxu0
    %1009 = vmatprep.mubr.bf16.mxu0 0
    %1010 = vmatmul.mubr.bf16.gmra.mxu0 %v864
    %v1011 = vpop.f32.mrf.mxu0
    %v1012 = vadd.f32 0.0, %v1011
    %v1013 = vpop.f32.mrf.mxu0
    %v1014 = vpop.f32.mrf.mxu0
    %v1015 = vadd.f32 0.0, %v1014
    %v1016 = vpop.f32.mrf.mxu0
    %1017 = vdwg.mxu0
    %v1018 = vld [vmem:[%s1 + $0x100] sm:$0xff]
    %v1019 = vld [vmem:[%s1 + $0x108] sm:$0xff]
    %v1020 = vld [vmem:[%s1 + $0x110] sm:$0xff]
    %v1021 = vld [vmem:[%s1 + $0x118] sm:$0xff]
    %v1022 = vld [vmem:[%s1 + $0x120] sm:$0xff]
    %v1023 = vld [vmem:[%s1 + $0x128] sm:$0xff]
    %v1024 = vld [vmem:[%s1 + $0x130] sm:$0xff]
    %v1025 = vld [vmem:[%s1 + $0x138] sm:$0xff]
    %v1026 = vld [vmem:[%s1 + $0x140] sm:$0xff]
    %v1027 = vld [vmem:[%s1 + $0x148] sm:$0xff]
    %v1028 = vld [vmem:[%s1 + $0x150] sm:$0xff]
    %v1029 = vld [vmem:[%s1 + $0x158] sm:$0xff]
    %v1030 = vld [vmem:[%s1 + $0x160] sm:$0xff]
    %v1031 = vld [vmem:[%s1 + $0x168] sm:$0xff]
    %v1032 = vld [vmem:[%s1 + $0x170] sm:$0xff]
    %v1033 = vld [vmem:[%s1 + $0x178] sm:$0xff]
    %1035 = vset.pattern.permute.xlu0 0
    %1036 = vperm.xlu0 %1035, %v1018
    %v1037 = vpop.permute.xlu0 %1036
    %1040 = vset.pattern.permute.xlu0 0
    %1041 = vperm.xlu0 %1040, %v1019
    %v1042 = vpop.permute.xlu0 %1041
    %1045 = vset.pattern.permute.xlu0 0
    %1046 = vperm.xlu0 %1045, %v1020
    %v1047 = vpop.permute.xlu0 %1046
    %1050 = vset.pattern.permute.xlu0 0
    %1051 = vperm.xlu0 %1050, %v1021
    %v1052 = vpop.permute.xlu0 %1051
    %1055 = vset.pattern.permute.xlu0 0
    %1056 = vperm.xlu0 %1055, %v1022
    %v1057 = vpop.permute.xlu0 %1056
    %1060 = vset.pattern.permute.xlu0 0
    %1061 = vperm.xlu0 %1060, %v1023
    %v1062 = vpop.permute.xlu0 %1061
    %1065 = vset.pattern.permute.xlu0 0
    %1066 = vperm.xlu0 %1065, %v1024
    %v1067 = vpop.permute.xlu0 %1066
    %1070 = vset.pattern.permute.xlu0 0
    %1071 = vperm.xlu0 %1070, %v1025
    %v1072 = vpop.permute.xlu0 %1071
    %1075 = vset.pattern.permute.xlu0 0
    %1076 = vperm.xlu0 %1075, %v1026
    %v1077 = vpop.permute.xlu0 %1076
    %1080 = vset.pattern.permute.xlu0 0
    %1081 = vperm.xlu0 %1080, %v1027
    %v1082 = vpop.permute.xlu0 %1081
    %1085 = vset.pattern.permute.xlu0 0
    %1086 = vperm.xlu0 %1085, %v1028
    %v1087 = vpop.permute.xlu0 %1086
    %1090 = vset.pattern.permute.xlu0 0
    %1091 = vperm.xlu0 %1090, %v1029
    %v1092 = vpop.permute.xlu0 %1091
    %1095 = vset.pattern.permute.xlu0 0
    %1096 = vperm.xlu0 %1095, %v1030
    %v1097 = vpop.permute.xlu0 %1096
    %1100 = vset.pattern.permute.xlu0 0
    %1101 = vperm.xlu0 %1100, %v1031
    %v1102 = vpop.permute.xlu0 %1101
    %1105 = vset.pattern.permute.xlu0 0
    %1106 = vperm.xlu0 %1105, %v1032
    %v1107 = vpop.permute.xlu0 %1106
    %1110 = vset.pattern.permute.xlu0 0
    %1111 = vperm.xlu0 %1110, %v1033
    %v1112 = vpop.permute.xlu0 %1111
    %v1114 = vmul.f32 %v1037, %v956
    %v1115 = vmul.f32 %v1042, %v959
    %v1116 = vmul.f32 %v1047, %v964
    %v1117 = vmul.f32 %v1052, %v967
    %v1118 = vmul.f32 %v1057, %v972
    %v1119 = vmul.f32 %v1062, %v975
    %v1120 = vmul.f32 %v1067, %v980
    %v1121 = vmul.f32 %v1072, %v983
    %v1122 = vmul.f32 %v1077, %v988
    %v1123 = vmul.f32 %v1082, %v991
    %v1124 = vmul.f32 %v1087, %v996
    %v1125 = vmul.f32 %v1092, %v999
    %v1126 = vmul.f32 %v1097, %v1004
    %v1127 = vmul.f32 %v1102, %v1007
    %v1128 = vmul.f32 %v1107, %v1012
    %v1129 = vmul.f32 %v1112, %v1015
    %v1130 = vadd.f32 %v776, %v1114
    %v1131 = vadd.f32 %v777, %v1115
    %v1132 = vadd.f32 %v778, %v1116
    %v1133 = vadd.f32 %v779, %v1117
    %v1134 = vadd.f32 %v780, %v1118
    %v1135 = vadd.f32 %v781, %v1119
    %v1136 = vadd.f32 %v782, %v1120
    %v1137 = vadd.f32 %v783, %v1121
    %v1138 = vadd.f32 %v784, %v1122
    %v1139 = vadd.f32 %v785, %v1123
    %v1140 = vadd.f32 %v786, %v1124
    %v1141 = vadd.f32 %v787, %v1125
    %v1142 = vadd.f32 %v788, %v1126
    %v1143 = vadd.f32 %v789, %v1127
    %v1144 = vadd.f32 %v790, %v1128
    %v1145 = vadd.f32 %v791, %v1129
    %vm1146 = vcmp.gt.f32.partialorder %v1130, 0.0
    %vm1147 = vcmp.gt.f32.partialorder %v1131, 0.0
    %vm1148 = vcmp.gt.f32.partialorder %v1132, 0.0
    %vm1149 = vcmp.gt.f32.partialorder %v1133, 0.0
    %vm1150 = vcmp.gt.f32.partialorder %v1134, 0.0
    %vm1151 = vcmp.gt.f32.partialorder %v1135, 0.0
    %vm1152 = vcmp.gt.f32.partialorder %v1136, 0.0
    %vm1153 = vcmp.gt.f32.partialorder %v1137, 0.0
    %vm1154 = vcmp.gt.f32.partialorder %v1138, 0.0
    %vm1155 = vcmp.gt.f32.partialorder %v1139, 0.0
    %vm1156 = vcmp.gt.f32.partialorder %v1140, 0.0
    %vm1157 = vcmp.gt.f32.partialorder %v1141, 0.0
    %vm1158 = vcmp.gt.f32.partialorder %v1142, 0.0
    %vm1159 = vcmp.gt.f32.partialorder %v1143, 0.0
    %vm1160 = vcmp.gt.f32.partialorder %v1144, 0.0
    %vm1161 = vcmp.gt.f32.partialorder %v1145, 0.0
    %v1162 = vmul.f32 %v1130, 0.01
    %v1163 = vmul.f32 %v1131, 0.01
    %v1164 = vmul.f32 %v1132, 0.01
    %v1165 = vmul.f32 %v1133, 0.01
    %v1166 = vmul.f32 %v1134, 0.01
    %v1167 = vmul.f32 %v1135, 0.01
    %v1168 = vmul.f32 %v1136, 0.01
    %v1169 = vmul.f32 %v1137, 0.01
    %v1170 = vmul.f32 %v1138, 0.01
    %v1171 = vmul.f32 %v1139, 0.01
    %v1172 = vmul.f32 %v1140, 0.01
    %v1173 = vmul.f32 %v1141, 0.01
    %v1174 = vmul.f32 %v1142, 0.01
    %v1175 = vmul.f32 %v1143, 0.01
    %v1176 = vmul.f32 %v1144, 0.01
    %v1177 = vmul.f32 %v1145, 0.01
    %v1178 = vsel %vm1146, %v1130, %v1162
    %v1179 = vsel %vm1147, %v1131, %v1163
    %v1180 = vsel %vm1148, %v1132, %v1164
    %v1181 = vsel %vm1149, %v1133, %v1165
    %v1182 = vsel %vm1150, %v1134, %v1166
    %v1183 = vsel %vm1151, %v1135, %v1167
    %v1184 = vsel %vm1152, %v1136, %v1168
    %v1185 = vsel %vm1153, %v1137, %v1169
    %v1186 = vsel %vm1154, %v1138, %v1170
    %v1187 = vsel %vm1155, %v1139, %v1171
    %v1188 = vsel %vm1156, %v1140, %v1172
    %v1189 = vsel %vm1157, %v1141, %v1173
    %v1190 = vsel %vm1158, %v1142, %v1174
    %v1191 = vsel %vm1159, %v1143, %v1175
    %v1192 = vsel %vm1160, %v1144, %v1176
    %v1193 = vsel %vm1161, %v1145, %v1177
    %v1194 = vpack.c.bf16 %v1179, %v1178
    %v1195 = vpack.c.bf16 %v1181, %v1180
    %v1196 = vpack.c.bf16 %v1183, %v1182
    %v1197 = vpack.c.bf16 %v1185, %v1184
    %v1198 = vpack.c.bf16 %v1187, %v1186
    %v1199 = vpack.c.bf16 %v1189, %v1188
    %v1200 = vpack.c.bf16 %v1191, %v1190
    %v1201 = vpack.c.bf16 %v1193, %v1192
    %v1202 = vld [vmem:[%s0] sm:$0xf]
    %v1203 = vld [vmem:[%s0 + $0x4] sm:$0xf]
    %v1204 = vld [vmem:[%s0 + $0x8] sm:$0xf]
    %v1205 = vld [vmem:[%s0 + $0xc] sm:$0xf]
    %v1206 = vld [vmem:[%s0 + $0x10] sm:$0xf]
    %v1207 = vld [vmem:[%s0 + $0x14] sm:$0xf]
    %v1208 = vld [vmem:[%s0 + $0x18] sm:$0xf]
    %v1209 = vld [vmem:[%s0 + $0x1c] sm:$0xf]
    %v1210 = vld [vmem:[%s0 + $0x20] sm:$0xf]
    %v1211 = vld [vmem:[%s0 + $0x24] sm:$0xf]
    %v1212 = vld [vmem:[%s0 + $0x28] sm:$0xf]
    %v1213 = vld [vmem:[%s0 + $0x2c] sm:$0xf]
    %v1214 = vld [vmem:[%s0 + $0x30] sm:$0xf]
    %v1215 = vld [vmem:[%s0 + $0x34] sm:$0xf]
    %v1216 = vld [vmem:[%s0 + $0x38] sm:$0xf]
    %v1217 = vld [vmem:[%s0 + $0x3c] sm:$0xf]
    %v1218 = vld [vmem:[%s0 + $0x40] sm:$0xf]
    %v1219 = vld [vmem:[%s0 + $0x44] sm:$0xf]
    %v1220 = vld [vmem:[%s0 + $0x48] sm:$0xf]
    %v1221 = vld [vmem:[%s0 + $0x4c] sm:$0xf]
    %v1222 = vld [vmem:[%s0 + $0x50] sm:$0xf]
    %v1223 = vld [vmem:[%s0 + $0x54] sm:$0xf]
    %v1224 = vld [vmem:[%s0 + $0x58] sm:$0xf]
    %v1225 = vld [vmem:[%s0 + $0x5c] sm:$0xf]
    %v1226 = vld [vmem:[%s0 + $0x60] sm:$0xf]
    %v1227 = vld [vmem:[%s0 + $0x64] sm:$0xf]
    %v1228 = vld [vmem:[%s0 + $0x68] sm:$0xf]
    %v1229 = vld [vmem:[%s0 + $0x6c] sm:$0xf]
    %v1230 = vld [vmem:[%s0 + $0x70] sm:$0xf]
    %v1231 = vld [vmem:[%s0 + $0x74] sm:$0xf]
    %v1232 = vld [vmem:[%s0 + $0x78] sm:$0xf]
    %v1233 = vld [vmem:[%s0 + $0x7c] sm:$0xf]
    %v1266 = vunpack.c.l.b16 %v1202
    %v1267 = vunpack.c.l.b16 %v1203
    %v1268 = vunpack.c.l.b16 %v1204
    %v1269 = vunpack.c.l.b16 %v1205
    %v1270 = vunpack.c.l.b16 %v1206
    %v1271 = vunpack.c.l.b16 %v1207
    %v1272 = vunpack.c.l.b16 %v1208
    %v1273 = vunpack.c.l.b16 %v1209
    %v1274 = vunpack.c.l.b16 %v1210
    %v1275 = vunpack.c.l.b16 %v1211
    %v1276 = vunpack.c.l.b16 %v1212
    %v1277 = vunpack.c.l.b16 %v1213
    %v1278 = vunpack.c.l.b16 %v1214
    %v1279 = vunpack.c.l.b16 %v1215
    %v1280 = vunpack.c.l.b16 %v1216
    %v1281 = vunpack.c.l.b16 %v1217
    %v1282 = vunpack.c.l.b16 %v1218
    %v1283 = vunpack.c.l.b16 %v1219
    %v1284 = vunpack.c.l.b16 %v1220
    %v1285 = vunpack.c.l.b16 %v1221
    %v1286 = vunpack.c.l.b16 %v1222
    %v1287 = vunpack.c.l.b16 %v1223
    %v1288 = vunpack.c.l.b16 %v1224
    %v1289 = vunpack.c.l.b16 %v1225
    %v1290 = vunpack.c.l.b16 %v1226
    %v1291 = vunpack.c.l.b16 %v1227
    %v1292 = vunpack.c.l.b16 %v1228
    %v1293 = vunpack.c.l.b16 %v1229
    %v1294 = vunpack.c.l.b16 %v1230
    %v1295 = vunpack.c.l.b16 %v1231
    %v1296 = vunpack.c.l.b16 %v1232
    %v1297 = vunpack.c.l.b16 %v1233
    %v1298 = vpack.c.b16 %v1267, %v1266
    %v1299 = vpack.c.b16 %v1269, %v1268
    %v1300 = vpack.c.b16 %v1271, %v1270
    %v1301 = vpack.c.b16 %v1273, %v1272
    %v1302 = vpack.c.b16 %v1275, %v1274
    %v1303 = vpack.c.b16 %v1277, %v1276
    %v1304 = vpack.c.b16 %v1279, %v1278
    %v1305 = vpack.c.b16 %v1281, %v1280
    %v1306 = vpack.c.b16 %v1283, %v1282
    %v1307 = vpack.c.b16 %v1285, %v1284
    %v1308 = vpack.c.b16 %v1287, %v1286
    %v1309 = vpack.c.b16 %v1289, %v1288
    %v1310 = vpack.c.b16 %v1291, %v1290
    %v1311 = vpack.c.b16 %v1293, %v1292
    %v1312 = vpack.c.b16 %v1295, %v1294
    %v1313 = vpack.c.b16 %v1297, %v1296
    %1330 = vmatprep.subr.bf16.mxu0 0
    %1331 = vmatpush1.bf16.msra.mxu0 %v1201
    %1332 = vmatprep.subr.bf16.mxu0 0
    %1333 = vmatpush1.bf16.msra.mxu0 %v1200
    %1334 = vmatprep.subr.bf16.mxu0 0
    %1335 = vmatpush1.bf16.msra.mxu0 %v1199
    %1336 = vmatprep.subr.bf16.mxu0 0
    %1337 = vmatpush1.bf16.msra.mxu0 %v1198
    %1338 = vmatprep.subr.bf16.mxu0 0
    %1339 = vmatpush1.bf16.msra.mxu0 %v1197
    %1340 = vmatprep.subr.bf16.mxu0 0
    %1341 = vmatpush1.bf16.msra.mxu0 %v1196
    %1342 = vmatprep.subr.bf16.mxu0 0
    %1343 = vmatpush1.bf16.msra.mxu0 %v1195
    %1344 = vmatprep.subr.bf16.mxu0 0
    %1345 = vmatpush1.bf16.msra.mxu0 %v1194
    %1346 = vmatprep.subr.bf16.mxu0 0
    %1347 = vmatpush2.bf16.msra.mxu0 0
    %1348 = vmatprep.subr.bf16.mxu0 0
    %1349 = vmatpush2.bf16.msra.mxu0 0
    %1350 = vmatprep.subr.bf16.mxu0 0
    %1351 = vmatpush2.bf16.msra.mxu0 0
    %1352 = vmatprep.subr.bf16.mxu0 0
    %1353 = vmatpush2.bf16.msra.mxu0 0
    %1354 = vmatprep.subr.bf16.mxu0 0
    %1355 = vmatpush2.bf16.msra.mxu0 0
    %1356 = vmatprep.subr.bf16.mxu0 0
    %1357 = vmatpush2.bf16.msra.mxu0 0
    %1358 = vmatprep.subr.bf16.mxu0 0
    %1359 = vmatpush2.bf16.msra.mxu0 0
    %1360 = vmatprep.subr.bf16.mxu0 0
    %1361 = vmatpush2.bf16.msra.mxu0 0
    %1362 = vmatprep.mubr.bf16.mxu0 0
    %1363 = vmatmul.mubr.bf16.gmra.mxu0 %v1298
    %v1364 = vpop.f32.mrf.mxu0
    %v1365 = vadd.f32 0.0, %v1364
    %v1366 = vpop.f32.mrf.mxu0
    %v1367 = vpop.f32.mrf.mxu0
    %v1368 = vadd.f32 0.0, %v1367
    %v1369 = vpop.f32.mrf.mxu0
    %1370 = vmatprep.mubr.bf16.mxu0 0
    %1371 = vmatmul.mubr.bf16.gmra.mxu0 %v1299
    %v1372 = vpop.f32.mrf.mxu0
    %v1373 = vadd.f32 0.0, %v1372
    %v1374 = vpop.f32.mrf.mxu0
    %v1375 = vpop.f32.mrf.mxu0
    %v1376 = vadd.f32 0.0, %v1375
    %v1377 = vpop.f32.mrf.mxu0
    %1378 = vmatprep.mubr.bf16.mxu0 0
    %1379 = vmatmul.mubr.bf16.gmra.mxu0 %v1300
    %v1380 = vpop.f32.mrf.mxu0
    %v1381 = vadd.f32 0.0, %v1380
    %v1382 = vpop.f32.mrf.mxu0
    %v1383 = vpop.f32.mrf.mxu0
    %v1384 = vadd.f32 0.0, %v1383
    %v1385 = vpop.f32.mrf.mxu0
    %1386 = vmatprep.mubr.bf16.mxu0 0
    %1387 = vmatmul.mubr.bf16.gmra.mxu0 %v1301
    %v1388 = vpop.f32.mrf.mxu0
    %v1389 = vadd.f32 0.0, %v1388
    %v1390 = vpop.f32.mrf.mxu0
    %v1391 = vpop.f32.mrf.mxu0
    %v1392 = vadd.f32 0.0, %v1391
    %v1393 = vpop.f32.mrf.mxu0
    %1394 = vmatprep.mubr.bf16.mxu0 0
    %1395 = vmatmul.mubr.bf16.gmra.mxu0 %v1302
    %v1396 = vpop.f32.mrf.mxu0
    %v1397 = vadd.f32 0.0, %v1396
    %v1398 = vpop.f32.mrf.mxu0
    %v1399 = vpop.f32.mrf.mxu0
    %v1400 = vadd.f32 0.0, %v1399
    %v1401 = vpop.f32.mrf.mxu0
    %1402 = vmatprep.mubr.bf16.mxu0 0
    %1403 = vmatmul.mubr.bf16.gmra.mxu0 %v1303
    %v1404 = vpop.f32.mrf.mxu0
    %v1405 = vadd.f32 0.0, %v1404
    %v1406 = vpop.f32.mrf.mxu0
    %v1407 = vpop.f32.mrf.mxu0
    %v1408 = vadd.f32 0.0, %v1407
    %v1409 = vpop.f32.mrf.mxu0
    %1410 = vmatprep.mubr.bf16.mxu0 0
    %1411 = vmatmul.mubr.bf16.gmra.mxu0 %v1304
    %v1412 = vpop.f32.mrf.mxu0
    %v1413 = vadd.f32 0.0, %v1412
    %v1414 = vpop.f32.mrf.mxu0
    %v1415 = vpop.f32.mrf.mxu0
    %v1416 = vadd.f32 0.0, %v1415
    %v1417 = vpop.f32.mrf.mxu0
    %1418 = vmatprep.mubr.bf16.mxu0 0
    %1419 = vmatmul.mubr.bf16.gmra.mxu0 %v1305
    %v1420 = vpop.f32.mrf.mxu0
    %v1421 = vadd.f32 0.0, %v1420
    %v1422 = vpop.f32.mrf.mxu0
    %v1423 = vpop.f32.mrf.mxu0
    %v1424 = vadd.f32 0.0, %v1423
    %v1425 = vpop.f32.mrf.mxu0
    %1426 = vmatprep.mubr.bf16.mxu0 0
    %1427 = vmatmul.mubr.bf16.gmra.mxu0 %v1306
    %v1428 = vpop.f32.mrf.mxu0
    %v1429 = vadd.f32 0.0, %v1428
    %v1430 = vpop.f32.mrf.mxu0
    %v1431 = vpop.f32.mrf.mxu0
    %v1432 = vadd.f32 0.0, %v1431
    %v1433 = vpop.f32.mrf.mxu0
    %1434 = vmatprep.mubr.bf16.mxu0 0
    %1435 = vmatmul.mubr.bf16.gmra.mxu0 %v1307
    %v1436 = vpop.f32.mrf.mxu0
    %v1437 = vadd.f32 0.0, %v1436
    %v1438 = vpop.f32.mrf.mxu0
    %v1439 = vpop.f32.mrf.mxu0
    %v1440 = vadd.f32 0.0, %v1439
    %v1441 = vpop.f32.mrf.mxu0
    %1442 = vmatprep.mubr.bf16.mxu0 0
    %1443 = vmatmul.mubr.bf16.gmra.mxu0 %v1308
    %v1444 = vpop.f32.mrf.mxu0
    %v1445 = vadd.f32 0.0, %v1444
    %v1446 = vpop.f32.mrf.mxu0
    %v1447 = vpop.f32.mrf.mxu0
    %v1448 = vadd.f32 0.0, %v1447
    %v1449 = vpop.f32.mrf.mxu0
    %1450 = vmatprep.mubr.bf16.mxu0 0
    %1451 = vmatmul.mubr.bf16.gmra.mxu0 %v1309
    %v1452 = vpop.f32.mrf.mxu0
    %v1453 = vadd.f32 0.0, %v1452
    %v1454 = vpop.f32.mrf.mxu0
    %v1455 = vpop.f32.mrf.mxu0
    %v1456 = vadd.f32 0.0, %v1455
    %v1457 = vpop.f32.mrf.mxu0
    %1458 = vmatprep.mubr.bf16.mxu0 0
    %1459 = vmatmul.mubr.bf16.gmra.mxu0 %v1310
    %v1460 = vpop.f32.mrf.mxu0
    %v1461 = vadd.f32 0.0, %v1460
    %v1462 = vpop.f32.mrf.mxu0
    %v1463 = vpop.f32.mrf.mxu0
    %v1464 = vadd.f32 0.0, %v1463
    %v1465 = vpop.f32.mrf.mxu0
    %1466 = vmatprep.mubr.bf16.mxu0 0
    %1467 = vmatmul.mubr.bf16.gmra.mxu0 %v1311
    %v1468 = vpop.f32.mrf.mxu0
    %v1469 = vadd.f32 0.0, %v1468
    %v1470 = vpop.f32.mrf.mxu0
    %v1471 = vpop.f32.mrf.mxu0
    %v1472 = vadd.f32 0.0, %v1471
    %v1473 = vpop.f32.mrf.mxu0
    %1474 = vmatprep.mubr.bf16.mxu0 0
    %1475 = vmatmul.mubr.bf16.gmra.mxu0 %v1312
    %v1476 = vpop.f32.mrf.mxu0
    %v1477 = vadd.f32 0.0, %v1476
    %v1478 = vpop.f32.mrf.mxu0
    %v1479 = vpop.f32.mrf.mxu0
    %v1480 = vadd.f32 0.0, %v1479
    %v1481 = vpop.f32.mrf.mxu0
    %1482 = vmatprep.mubr.bf16.mxu0 0
    %1483 = vmatmul.mubr.bf16.gmra.mxu0 %v1313
    %v1484 = vpop.f32.mrf.mxu0
    %v1485 = vadd.f32 0.0, %v1484
    %v1486 = vpop.f32.mrf.mxu0
    %v1487 = vpop.f32.mrf.mxu0
    %v1488 = vadd.f32 0.0, %v1487
    %v1489 = vpop.f32.mrf.mxu0
    %1490 = vmatprep.mubr.bf16.mxu0 0
    %1491 = vmatmul.mubr.bf16.gmra.mxu0 %v857
    %v1492 = vpop.f32.mrf.mxu0
    %v1493 = vadd.f32 0.0, %v1492
    %v1494 = vpop.f32.mrf.mxu0
    %v1495 = vpop.f32.mrf.mxu0
    %v1496 = vadd.f32 0.0, %v1495
    %v1497 = vpop.f32.mrf.mxu0
    %1498 = vmatprep.mubr.bf16.mxu0 0
    %1499 = vmatmul.mubr.bf16.gmra.mxu0 %v858
    %v1500 = vpop.f32.mrf.mxu0
    %v1501 = vadd.f32 0.0, %v1500
    %v1502 = vpop.f32.mrf.mxu0
    %v1503 = vpop.f32.mrf.mxu0
    %v1504 = vadd.f32 0.0, %v1503
    %v1505 = vpop.f32.mrf.mxu0
    %1506 = vmatprep.mubr.bf16.mxu0 0
    %1507 = vmatmul.mubr.bf16.gmra.mxu0 %v859
    %v1508 = vpop.f32.mrf.mxu0
    %v1509 = vadd.f32 0.0, %v1508
    %v1510 = vpop.f32.mrf.mxu0
    %v1511 = vpop.f32.mrf.mxu0
    %v1512 = vadd.f32 0.0, %v1511
    %v1513 = vpop.f32.mrf.mxu0
    %1514 = vmatprep.mubr.bf16.mxu0 0
    %1515 = vmatmul.mubr.bf16.gmra.mxu0 %v860
    %v1516 = vpop.f32.mrf.mxu0
    %v1517 = vadd.f32 0.0, %v1516
    %v1518 = vpop.f32.mrf.mxu0
    %v1519 = vpop.f32.mrf.mxu0
    %v1520 = vadd.f32 0.0, %v1519
    %v1521 = vpop.f32.mrf.mxu0
    %1522 = vmatprep.mubr.bf16.mxu0 0
    %1523 = vmatmul.mubr.bf16.gmra.mxu0 %v861
    %v1524 = vpop.f32.mrf.mxu0
    %v1525 = vadd.f32 0.0, %v1524
    %v1526 = vpop.f32.mrf.mxu0
    %v1527 = vpop.f32.mrf.mxu0
    %v1528 = vadd.f32 0.0, %v1527
    %v1529 = vpop.f32.mrf.mxu0
    %1530 = vmatprep.mubr.bf16.mxu0 0
    %1531 = vmatmul.mubr.bf16.gmra.mxu0 %v862
    %v1532 = vpop.f32.mrf.mxu0
    %v1533 = vadd.f32 0.0, %v1532
    %v1534 = vpop.f32.mrf.mxu0
    %v1535 = vpop.f32.mrf.mxu0
    %v1536 = vadd.f32 0.0, %v1535
    %v1537 = vpop.f32.mrf.mxu0
    %1538 = vmatprep.mubr.bf16.mxu0 0
    %1539 = vmatmul.mubr.bf16.gmra.mxu0 %v863
    %v1540 = vpop.f32.mrf.mxu0
    %v1541 = vadd.f32 0.0, %v1540
    %v1542 = vpop.f32.mrf.mxu0
    %v1543 = vpop.f32.mrf.mxu0
    %v1544 = vadd.f32 0.0, %v1543
    %v1545 = vpop.f32.mrf.mxu0
    %1546 = vmatprep.mubr.bf16.mxu0 0
    %1547 = vmatmul.mubr.bf16.gmra.mxu0 %v864
    %v1548 = vpop.f32.mrf.mxu0
    %v1549 = vadd.f32 0.0, %v1548
    %v1550 = vpop.f32.mrf.mxu0
    %v1551 = vpop.f32.mrf.mxu0
    %v1552 = vadd.f32 0.0, %v1551
    %v1553 = vpop.f32.mrf.mxu0
    %1554 = vdwg.mxu0
    %v1555 = vld [vmem:[%s1] sm:$0xff]
    %v1556 = vld [vmem:[%s1 + $0x8] sm:$0xff]
    %v1557 = vld [vmem:[%s1 + $0x10] sm:$0xff]
    %v1558 = vld [vmem:[%s1 + $0x18] sm:$0xff]
    %v1559 = vld [vmem:[%s1 + $0x20] sm:$0xff]
    %v1560 = vld [vmem:[%s1 + $0x28] sm:$0xff]
    %v1561 = vld [vmem:[%s1 + $0x30] sm:$0xff]
    %v1562 = vld [vmem:[%s1 + $0x38] sm:$0xff]
    %v1563 = vld [vmem:[%s1 + $0x40] sm:$0xff]
    %v1564 = vld [vmem:[%s1 + $0x48] sm:$0xff]
    %v1565 = vld [vmem:[%s1 + $0x50] sm:$0xff]
    %v1566 = vld [vmem:[%s1 + $0x58] sm:$0xff]
    %v1567 = vld [vmem:[%s1 + $0x60] sm:$0xff]
    %v1568 = vld [vmem:[%s1 + $0x68] sm:$0xff]
    %v1569 = vld [vmem:[%s1 + $0x70] sm:$0xff]
    %v1570 = vld [vmem:[%s1 + $0x78] sm:$0xff]
    %v1571 = vld [vmem:[%s1 + $0x80] sm:$0xff]
    %v1572 = vld [vmem:[%s1 + $0x88] sm:$0xff]
    %v1573 = vld [vmem:[%s1 + $0x90] sm:$0xff]
    %v1574 = vld [vmem:[%s1 + $0x98] sm:$0xff]
    %v1575 = vld [vmem:[%s1 + $0xa0] sm:$0xff]
    %v1576 = vld [vmem:[%s1 + $0xa8] sm:$0xff]
    %v1577 = vld [vmem:[%s1 + $0xb0] sm:$0xff]
    %v1578 = vld [vmem:[%s1 + $0xb8] sm:$0xff]
    %v1579 = vld [vmem:[%s1 + $0xc0] sm:$0xff]
    %v1580 = vld [vmem:[%s1 + $0xc8] sm:$0xff]
    %v1581 = vld [vmem:[%s1 + $0xd0] sm:$0xff]
    %v1582 = vld [vmem:[%s1 + $0xd8] sm:$0xff]
    %v1583 = vld [vmem:[%s1 + $0xe0] sm:$0xff]
    %v1584 = vld [vmem:[%s1 + $0xe8] sm:$0xff]
    %v1585 = vld [vmem:[%s1 + $0xf0] sm:$0xff]
    %v1586 = vld [vmem:[%s1 + $0xf8] sm:$0xff]
    %1588 = vset.pattern.permute.xlu0 0
    %1589 = vperm.xlu0 %1588, %v1555
    %v1590 = vpop.permute.xlu0 %1589
    %1593 = vset.pattern.permute.xlu0 0
    %1594 = vperm.xlu0 %1593, %v1556
    %v1595 = vpop.permute.xlu0 %1594
    %1598 = vset.pattern.permute.xlu0 0
    %1599 = vperm.xlu0 %1598, %v1557
    %v1600 = vpop.permute.xlu0 %1599
    %1603 = vset.pattern.permute.xlu0 0
    %1604 = vperm.xlu0 %1603, %v1558
    %v1605 = vpop.permute.xlu0 %1604
    %1608 = vset.pattern.permute.xlu0 0
    %1609 = vperm.xlu0 %1608, %v1559
    %v1610 = vpop.permute.xlu0 %1609
    %1613 = vset.pattern.permute.xlu0 0
    %1614 = vperm.xlu0 %1613, %v1560
    %v1615 = vpop.permute.xlu0 %1614
    %1618 = vset.pattern.permute.xlu0 0
    %1619 = vperm.xlu0 %1618, %v1561
    %v1620 = vpop.permute.xlu0 %1619
    %1623 = vset.pattern.permute.xlu0 0
    %1624 = vperm.xlu0 %1623, %v1562
    %v1625 = vpop.permute.xlu0 %1624
    %1628 = vset.pattern.permute.xlu0 0
    %1629 = vperm.xlu0 %1628, %v1563
    %v1630 = vpop.permute.xlu0 %1629
    %1633 = vset.pattern.permute.xlu0 0
    %1634 = vperm.xlu0 %1633, %v1564
    %v1635 = vpop.permute.xlu0 %1634
    %1638 = vset.pattern.permute.xlu0 0
    %1639 = vperm.xlu0 %1638, %v1565
    %v1640 = vpop.permute.xlu0 %1639
    %1643 = vset.pattern.permute.xlu0 0
    %1644 = vperm.xlu0 %1643, %v1566
    %v1645 = vpop.permute.xlu0 %1644
    %1648 = vset.pattern.permute.xlu0 0
    %1649 = vperm.xlu0 %1648, %v1567
    %v1650 = vpop.permute.xlu0 %1649
    %1653 = vset.pattern.permute.xlu0 0
    %1654 = vperm.xlu0 %1653, %v1568
    %v1655 = vpop.permute.xlu0 %1654
    %1658 = vset.pattern.permute.xlu0 0
    %1659 = vperm.xlu0 %1658, %v1569
    %v1660 = vpop.permute.xlu0 %1659
    %1663 = vset.pattern.permute.xlu0 0
    %1664 = vperm.xlu0 %1663, %v1570
    %v1665 = vpop.permute.xlu0 %1664
    %1668 = vset.pattern.permute.xlu0 0
    %1669 = vperm.xlu0 %1668, %v1571
    %v1670 = vpop.permute.xlu0 %1669
    %1673 = vset.pattern.permute.xlu0 0
    %1674 = vperm.xlu0 %1673, %v1572
    %v1675 = vpop.permute.xlu0 %1674
    %1678 = vset.pattern.permute.xlu0 0
    %1679 = vperm.xlu0 %1678, %v1573
    %v1680 = vpop.permute.xlu0 %1679
    %1683 = vset.pattern.permute.xlu0 0
    %1684 = vperm.xlu0 %1683, %v1574
    %v1685 = vpop.permute.xlu0 %1684
    %1688 = vset.pattern.permute.xlu0 0
    %1689 = vperm.xlu0 %1688, %v1575
    %v1690 = vpop.permute.xlu0 %1689
    %1693 = vset.pattern.permute.xlu0 0
    %1694 = vperm.xlu0 %1693, %v1576
    %v1695 = vpop.permute.xlu0 %1694
    %1698 = vset.pattern.permute.xlu0 0
    %1699 = vperm.xlu0 %1698, %v1577
    %v1700 = vpop.permute.xlu0 %1699
    %1703 = vset.pattern.permute.xlu0 0
    %1704 = vperm.xlu0 %1703, %v1578
    %v1705 = vpop.permute.xlu0 %1704
    %1708 = vset.pattern.permute.xlu0 0
    %1709 = vperm.xlu0 %1708, %v1579
    %v1710 = vpop.permute.xlu0 %1709
    %1713 = vset.pattern.permute.xlu0 0
    %1714 = vperm.xlu0 %1713, %v1580
    %v1715 = vpop.permute.xlu0 %1714
    %1718 = vset.pattern.permute.xlu0 0
    %1719 = vperm.xlu0 %1718, %v1581
    %v1720 = vpop.permute.xlu0 %1719
    %1723 = vset.pattern.permute.xlu0 0
    %1724 = vperm.xlu0 %1723, %v1582
    %v1725 = vpop.permute.xlu0 %1724
    %1728 = vset.pattern.permute.xlu0 0
    %1729 = vperm.xlu0 %1728, %v1583
    %v1730 = vpop.permute.xlu0 %1729
    %1733 = vset.pattern.permute.xlu0 0
    %1734 = vperm.xlu0 %1733, %v1584
    %v1735 = vpop.permute.xlu0 %1734
    %1738 = vset.pattern.permute.xlu0 0
    %1739 = vperm.xlu0 %1738, %v1585
    %v1740 = vpop.permute.xlu0 %1739
    %1743 = vset.pattern.permute.xlu0 0
    %1744 = vperm.xlu0 %1743, %v1586
    %v1745 = vpop.permute.xlu0 %1744
    %v1747 = vmul.f32 %v1365, %v1590
    %v1748 = vmul.f32 %v1368, %v1595
    %v1749 = vmul.f32 %v1373, %v1600
    %v1750 = vmul.f32 %v1376, %v1605
    %v1751 = vmul.f32 %v1381, %v1610
    %v1752 = vmul.f32 %v1384, %v1615
    %v1753 = vmul.f32 %v1389, %v1620
    %v1754 = vmul.f32 %v1392, %v1625
    %v1755 = vmul.f32 %v1397, %v1630
    %v1756 = vmul.f32 %v1400, %v1635
    %v1757 = vmul.f32 %v1405, %v1640
    %v1758 = vmul.f32 %v1408, %v1645
    %v1759 = vmul.f32 %v1413, %v1650
    %v1760 = vmul.f32 %v1416, %v1655
    %v1761 = vmul.f32 %v1421, %v1660
    %v1762 = vmul.f32 %v1424, %v1665
    %v1763 = vmul.f32 %v1429, %v1670
    %v1764 = vmul.f32 %v1432, %v1675
    %v1765 = vmul.f32 %v1437, %v1680
    %v1766 = vmul.f32 %v1440, %v1685
    %v1767 = vmul.f32 %v1445, %v1690
    %v1768 = vmul.f32 %v1448, %v1695
    %v1769 = vmul.f32 %v1453, %v1700
    %v1770 = vmul.f32 %v1456, %v1705
    %v1771 = vmul.f32 %v1461, %v1710
    %v1772 = vmul.f32 %v1464, %v1715
    %v1773 = vmul.f32 %v1469, %v1720
    %v1774 = vmul.f32 %v1472, %v1725
    %v1775 = vmul.f32 %v1477, %v1730
    %v1776 = vmul.f32 %v1480, %v1735
    %v1777 = vmul.f32 %v1485, %v1740
    %v1778 = vmul.f32 %v1488, %v1745
    %v1779 = vmul.f32 %v1493, %v1037
    %v1780 = vmul.f32 %v1496, %v1042
    %v1781 = vmul.f32 %v1501, %v1047
    %v1782 = vmul.f32 %v1504, %v1052
    %v1783 = vmul.f32 %v1509, %v1057
    %v1784 = vmul.f32 %v1512, %v1062
    %v1785 = vmul.f32 %v1517, %v1067
    %v1786 = vmul.f32 %v1520, %v1072
    %v1787 = vmul.f32 %v1525, %v1077
    %v1788 = vmul.f32 %v1528, %v1082
    %v1789 = vmul.f32 %v1533, %v1087
    %v1790 = vmul.f32 %v1536, %v1092
    %v1791 = vmul.f32 %v1541, %v1097
    %v1792 = vmul.f32 %v1544, %v1102
    %v1793 = vmul.f32 %v1549, %v1107
    %v1794 = vmul.f32 %v1552, %v1112
    %v1795 = vpack.c.bf16 %v1748, %v1747
    %v1796 = vpack.c.bf16 %v1750, %v1749
    %v1797 = vpack.c.bf16 %v1752, %v1751
    %v1798 = vpack.c.bf16 %v1754, %v1753
    %v1799 = vpack.c.bf16 %v1756, %v1755
    %v1800 = vpack.c.bf16 %v1758, %v1757
    %v1801 = vpack.c.bf16 %v1760, %v1759
    %v1802 = vpack.c.bf16 %v1762, %v1761
    %v1803 = vpack.c.bf16 %v1764, %v1763
    %v1804 = vpack.c.bf16 %v1766, %v1765
    %v1805 = vpack.c.bf16 %v1768, %v1767
    %v1806 = vpack.c.bf16 %v1770, %v1769
    %v1807 = vpack.c.bf16 %v1772, %v1771
    %v1808 = vpack.c.bf16 %v1774, %v1773
    %v1809 = vpack.c.bf16 %v1776, %v1775
    %v1810 = vpack.c.bf16 %v1778, %v1777
    %v1811 = vpack.c.bf16 %v1780, %v1779
    %v1812 = vpack.c.bf16 %v1782, %v1781
    %v1813 = vpack.c.bf16 %v1784, %v1783
    %v1814 = vpack.c.bf16 %v1786, %v1785
    %v1815 = vpack.c.bf16 %v1788, %v1787
    %v1816 = vpack.c.bf16 %v1790, %v1789
    %v1817 = vpack.c.bf16 %v1792, %v1791
    %v1818 = vpack.c.bf16 %v1794, %v1793
    %v1819 = vld [vmem:[#allocation7] sm:$0xf]
    %v1820 = vld [vmem:[#allocation7 + $0x4] sm:$0xf]
    %v1821 = vld [vmem:[#allocation7 + $0x8] sm:$0xf]
    %v1822 = vld [vmem:[#allocation7 + $0xc] sm:$0xf]
    %v1823 = vld [vmem:[#allocation7 + $0x10] sm:$0xf]
    %v1824 = vld [vmem:[#allocation7 + $0x14] sm:$0xf]
    %v1825 = vld [vmem:[#allocation7 + $0x18] sm:$0xf]
    %v1826 = vld [vmem:[#allocation7 + $0x1c] sm:$0xf]
    %v1827 = vld [vmem:[#allocation7 + $0x20] sm:$0xf]
    %v1828 = vld [vmem:[#allocation7 + $0x24] sm:$0xf]
    %v1829 = vld [vmem:[#allocation7 + $0x28] sm:$0xf]
    %v1830 = vld [vmem:[#allocation7 + $0x2c] sm:$0xf]
    %v1831 = vld [vmem:[#allocation7 + $0x30] sm:$0xf]
    %v1832 = vld [vmem:[#allocation7 + $0x34] sm:$0xf]
    %v1833 = vld [vmem:[#allocation7 + $0x38] sm:$0xf]
    %v1834 = vld [vmem:[#allocation7 + $0x3c] sm:$0xf]
    %v1835 = vld [vmem:[%s6] sm:$0x1]
    %v1837 = vlaneseq
    %v1838 = vshrl.u32 %v1837, 7
    %v1839 = vsub.s32 0, %v1838
    %v1840 = vrot.slane %v1835, %v1839
    %v1858 = vunpack.c.l.b16 %v1819
    %v1859 = vunpack.c.l.b16 %v1820
    %v1860 = vunpack.c.l.b16 %v1821
    %v1861 = vunpack.c.l.b16 %v1822
    %v1862 = vunpack.c.l.b16 %v1823
    %v1863 = vunpack.c.l.b16 %v1824
    %v1864 = vunpack.c.l.b16 %v1825
    %v1865 = vunpack.c.l.b16 %v1826
    %v1866 = vunpack.c.l.b16 %v1827
    %v1867 = vunpack.c.l.b16 %v1828
    %v1868 = vunpack.c.l.b16 %v1829
    %v1869 = vunpack.c.l.b16 %v1830
    %v1870 = vunpack.c.l.b16 %v1831
    %v1871 = vunpack.c.l.b16 %v1832
    %v1872 = vunpack.c.l.b16 %v1833
    %v1873 = vunpack.c.l.b16 %v1834
    %v1874 = vpack.c.b16 %v1859, %v1858
    %v1875 = vpack.c.b16 %v1861, %v1860
    %v1876 = vpack.c.b16 %v1863, %v1862
    %v1877 = vpack.c.b16 %v1865, %v1864
    %v1878 = vpack.c.b16 %v1867, %v1866
    %v1879 = vpack.c.b16 %v1869, %v1868
    %v1880 = vpack.c.b16 %v1871, %v1870
    %v1881 = vpack.c.b16 %v1873, %v1872
    %1890 = vmatprep.subr.bf16.mxu0 0
    %1891 = vmatpush1.bf16.msra.mxu0 %v1881
    %1892 = vmatprep.subr.bf16.mxu0 0
    %1893 = vmatpush1.bf16.msra.mxu0 %v1880
    %1894 = vmatprep.subr.bf16.mxu0 0
    %1895 = vmatpush1.bf16.msra.mxu0 %v1879
    %1896 = vmatprep.subr.bf16.mxu0 0
    %1897 = vmatpush1.bf16.msra.mxu0 %v1878
    %1898 = vmatprep.subr.bf16.mxu0 0
    %1899 = vmatpush1.bf16.msra.mxu0 %v1877
    %1900 = vmatprep.subr.bf16.mxu0 0
    %1901 = vmatpush1.bf16.msra.mxu0 %v1876
    %1902 = vmatprep.subr.bf16.mxu0 0
    %1903 = vmatpush1.bf16.msra.mxu0 %v1875
    %1904 = vmatprep.subr.bf16.mxu0 0
    %1905 = vmatpush1.bf16.msra.mxu0 %v1874
    %1906 = vmatprep.subr.bf16.mxu0 0
    %1907 = vmatpush2.bf16.msra.mxu0 0
    %1908 = vmatprep.subr.bf16.mxu0 0
    %1909 = vmatpush2.bf16.msra.mxu0 0
    %1910 = vmatprep.subr.bf16.mxu0 0
    %1911 = vmatpush2.bf16.msra.mxu0 0
    %1912 = vmatprep.subr.bf16.mxu0 0
    %1913 = vmatpush2.bf16.msra.mxu0 0
    %1914 = vmatprep.subr.bf16.mxu0 0
    %1915 = vmatpush2.bf16.msra.mxu0 0
    %1916 = vmatprep.subr.bf16.mxu0 0
    %1917 = vmatpush2.bf16.msra.mxu0 0
    %1918 = vmatprep.subr.bf16.mxu0 0
    %1919 = vmatpush2.bf16.msra.mxu0 0
    %1920 = vmatprep.subr.bf16.mxu0 0
    %1921 = vmatpush2.bf16.msra.mxu0 0
    %1922 = vmatprep.mubr.bf16.mxu0 0
    %1923 = vmatmul.mubr.bf16.gmra.mxu0 %v1194
    %v1924 = vpop.f32.mrf.mxu0
    %v1925 = vadd.f32 %v1840, %v1924
    %v1926 = vpop.f32.mrf.mxu0
    %v1927 = vpop.f32.mrf.mxu0
    %v1928 = vadd.f32 %v1840, %v1927
    %v1929 = vpop.f32.mrf.mxu0
    %1930 = vmatprep.mubr.bf16.mxu0 0
    %1931 = vmatmul.mubr.bf16.gmra.mxu0 %v1195
    %v1932 = vpop.f32.mrf.mxu0
    %v1933 = vadd.f32 %v1840, %v1932
    %v1934 = vpop.f32.mrf.mxu0
    %v1935 = vpop.f32.mrf.mxu0
    %v1936 = vadd.f32 %v1840, %v1935
    %v1937 = vpop.f32.mrf.mxu0
    %1938 = vmatprep.mubr.bf16.mxu0 0
    %1939 = vmatmul.mubr.bf16.gmra.mxu0 %v1196
    %v1940 = vpop.f32.mrf.mxu0
    %v1941 = vadd.f32 %v1840, %v1940
    %v1942 = vpop.f32.mrf.mxu0
    %v1943 = vpop.f32.mrf.mxu0
    %v1944 = vadd.f32 %v1840, %v1943
    %v1945 = vpop.f32.mrf.mxu0
    %1946 = vmatprep.mubr.bf16.mxu0 0
    %1947 = vmatmul.mubr.bf16.gmra.mxu0 %v1197
    %v1948 = vpop.f32.mrf.mxu0
    %v1949 = vadd.f32 %v1840, %v1948
    %v1950 = vpop.f32.mrf.mxu0
    %v1951 = vpop.f32.mrf.mxu0
    %v1952 = vadd.f32 %v1840, %v1951
    %v1953 = vpop.f32.mrf.mxu0
    %1954 = vmatprep.mubr.bf16.mxu0 0
    %1955 = vmatmul.mubr.bf16.gmra.mxu0 %v1198
    %v1956 = vpop.f32.mrf.mxu0
    %v1957 = vadd.f32 %v1840, %v1956
    %v1958 = vpop.f32.mrf.mxu0
    %v1959 = vpop.f32.mrf.mxu0
    %v1960 = vadd.f32 %v1840, %v1959
    %v1961 = vpop.f32.mrf.mxu0
    %1962 = vmatprep.mubr.bf16.mxu0 0
    %1963 = vmatmul.mubr.bf16.gmra.mxu0 %v1199
    %v1964 = vpop.f32.mrf.mxu0
    %v1965 = vadd.f32 %v1840, %v1964
    %v1966 = vpop.f32.mrf.mxu0
    %v1967 = vpop.f32.mrf.mxu0
    %v1968 = vadd.f32 %v1840, %v1967
    %v1969 = vpop.f32.mrf.mxu0
    %1970 = vmatprep.mubr.bf16.mxu0 0
    %1971 = vmatmul.mubr.bf16.gmra.mxu0 %v1200
    %v1972 = vpop.f32.mrf.mxu0
    %v1973 = vadd.f32 %v1840, %v1972
    %v1974 = vpop.f32.mrf.mxu0
    %v1975 = vpop.f32.mrf.mxu0
    %v1976 = vadd.f32 %v1840, %v1975
    %v1977 = vpop.f32.mrf.mxu0
    %1978 = vmatprep.mubr.bf16.mxu0 0
    %1979 = vmatmul.mubr.bf16.gmra.mxu0 %v1201
    %v1980 = vpop.f32.mrf.mxu0
    %v1981 = vadd.f32 %v1840, %v1980
    %v1982 = vpop.f32.mrf.mxu0
    %v1983 = vpop.f32.mrf.mxu0
    %v1984 = vadd.f32 %v1840, %v1983
    %v1985 = vpop.f32.mrf.mxu0
    %1986 = vdwg.mxu0
    %v1987 = vld [vmem:[#allocation5] sm:$0xf]
    %v1988 = vld [vmem:[#allocation5 + $0x4] sm:$0xf]
    %v1989 = vld [vmem:[#allocation5 + $0x8] sm:$0xf]
    %v1990 = vld [vmem:[#allocation5 + $0xc] sm:$0xf]
    %v1991 = vld [vmem:[#allocation5 + $0x10] sm:$0xf]
    %v1992 = vld [vmem:[#allocation5 + $0x14] sm:$0xf]
    %v1993 = vld [vmem:[#allocation5 + $0x18] sm:$0xf]
    %v1994 = vld [vmem:[#allocation5 + $0x1c] sm:$0xf]
    %v1995 = vld [vmem:[#allocation5 + $0x20] sm:$0xf]
    %v1996 = vld [vmem:[#allocation5 + $0x24] sm:$0xf]
    %v1997 = vld [vmem:[#allocation5 + $0x28] sm:$0xf]
    %v1998 = vld [vmem:[#allocation5 + $0x2c] sm:$0xf]
    %v1999 = vld [vmem:[#allocation5 + $0x30] sm:$0xf]
    %v2000 = vld [vmem:[#allocation5 + $0x34] sm:$0xf]
    %v2001 = vld [vmem:[#allocation5 + $0x38] sm:$0xf]
    %v2002 = vld [vmem:[#allocation5 + $0x3c] sm:$0xf]
    %v2019 = vunpack.c.l.b16 %v1987
    %v2020 = vunpack.c.l.b16 %v1988
    %v2021 = vunpack.c.l.b16 %v1989
    %v2022 = vunpack.c.l.b16 %v1990
    %v2023 = vunpack.c.l.b16 %v1991
    %v2024 = vunpack.c.l.b16 %v1992
    %v2025 = vunpack.c.l.b16 %v1993
    %v2026 = vunpack.c.l.b16 %v1994
    %v2027 = vunpack.c.l.b16 %v1995
    %v2028 = vunpack.c.l.b16 %v1996
    %v2029 = vunpack.c.l.b16 %v1997
    %v2030 = vunpack.c.l.b16 %v1998
    %v2031 = vunpack.c.l.b16 %v1999
    %v2032 = vunpack.c.l.b16 %v2000
    %v2033 = vunpack.c.l.b16 %v2001
    %v2034 = vunpack.c.l.b16 %v2002
    %v2035 = vpack.c.b16 %v2020, %v2019
    %v2036 = vpack.c.b16 %v2022, %v2021
    %v2037 = vpack.c.b16 %v2024, %v2023
    %v2038 = vpack.c.b16 %v2026, %v2025
    %v2039 = vpack.c.b16 %v2028, %v2027
    %v2040 = vpack.c.b16 %v2030, %v2029
    %v2041 = vpack.c.b16 %v2032, %v2031
    %v2042 = vpack.c.b16 %v2034, %v2033
    %2051 = vmatprep.subr.bf16.mxu0 0
    %2052 = vmatpush1.bf16.msra.mxu0 %v2042
    %2053 = vmatprep.subr.bf16.mxu0 0
    %2054 = vmatpush1.bf16.msra.mxu0 %v2041
    %2055 = vmatprep.subr.bf16.mxu0 0
    %2056 = vmatpush1.bf16.msra.mxu0 %v2040
    %2057 = vmatprep.subr.bf16.mxu0 0
    %2058 = vmatpush1.bf16.msra.mxu0 %v2039
    %2059 = vmatprep.subr.bf16.mxu0 0
    %2060 = vmatpush1.bf16.msra.mxu0 %v2038
    %2061 = vmatprep.subr.bf16.mxu0 0
    %2062 = vmatpush1.bf16.msra.mxu0 %v2037
    %2063 = vmatprep.subr.bf16.mxu0 0
    %2064 = vmatpush1.bf16.msra.mxu0 %v2036
    %2065 = vmatprep.subr.bf16.mxu0 0
    %2066 = vmatpush1.bf16.msra.mxu0 %v2035
    %2067 = vmatprep.subr.bf16.mxu0 0
    %2068 = vmatpush2.bf16.msra.mxu0 0
    %2069 = vmatprep.subr.bf16.mxu0 0
    %2070 = vmatpush2.bf16.msra.mxu0 0
    %2071 = vmatprep.subr.bf16.mxu0 0
    %2072 = vmatpush2.bf16.msra.mxu0 0
    %2073 = vmatprep.subr.bf16.mxu0 0
    %2074 = vmatpush2.bf16.msra.mxu0 0
    %2075 = vmatprep.subr.bf16.mxu0 0
    %2076 = vmatpush2.bf16.msra.mxu0 0
    %2077 = vmatprep.subr.bf16.mxu0 0
    %2078 = vmatpush2.bf16.msra.mxu0 0
    %2079 = vmatprep.subr.bf16.mxu0 0
    %2080 = vmatpush2.bf16.msra.mxu0 0
    %2081 = vmatprep.subr.bf16.mxu0 0
    %2082 = vmatpush2.bf16.msra.mxu0 0
    %2083 = vmatprep.mubr.bf16.mxu0 0
    %2084 = vmatmul.mubr.bf16.gmra.mxu0 %v1795
    %v2085 = vpop.f32.mrf.mxu0
    %v2086 = vadd.f32 0.0, %v2085
    %v2087 = vpop.f32.mrf.mxu0
    %v2088 = vpop.f32.mrf.mxu0
    %v2089 = vadd.f32 0.0, %v2088
    %v2090 = vpop.f32.mrf.mxu0
    %2091 = vmatprep.mubr.bf16.mxu0 0
    %2092 = vmatmul.mubr.bf16.gmra.mxu0 %v1796
    %v2093 = vpop.f32.mrf.mxu0
    %v2094 = vadd.f32 0.0, %v2093
    %v2095 = vpop.f32.mrf.mxu0
    %v2096 = vpop.f32.mrf.mxu0
    %v2097 = vadd.f32 0.0, %v2096
    %v2098 = vpop.f32.mrf.mxu0
    %2099 = vmatprep.mubr.bf16.mxu0 0
    %2100 = vmatmul.mubr.bf16.gmra.mxu0 %v1797
    %v2101 = vpop.f32.mrf.mxu0
    %v2102 = vadd.f32 0.0, %v2101
    %v2103 = vpop.f32.mrf.mxu0
    %v2104 = vpop.f32.mrf.mxu0
    %v2105 = vadd.f32 0.0, %v2104
    %v2106 = vpop.f32.mrf.mxu0
    %2107 = vmatprep.mubr.bf16.mxu0 0
    %2108 = vmatmul.mubr.bf16.gmra.mxu0 %v1798
    %v2109 = vpop.f32.mrf.mxu0
    %v2110 = vadd.f32 0.0, %v2109
    %v2111 = vpop.f32.mrf.mxu0
    %v2112 = vpop.f32.mrf.mxu0
    %v2113 = vadd.f32 0.0, %v2112
    %v2114 = vpop.f32.mrf.mxu0
    %2115 = vmatprep.mubr.bf16.mxu0 0
    %2116 = vmatmul.mubr.bf16.gmra.mxu0 %v1799
    %v2117 = vpop.f32.mrf.mxu0
    %v2118 = vadd.f32 0.0, %v2117
    %v2119 = vpop.f32.mrf.mxu0
    %v2120 = vpop.f32.mrf.mxu0
    %v2121 = vadd.f32 0.0, %v2120
    %v2122 = vpop.f32.mrf.mxu0
    %2123 = vmatprep.mubr.bf16.mxu0 0
    %2124 = vmatmul.mubr.bf16.gmra.mxu0 %v1800
    %v2125 = vpop.f32.mrf.mxu0
    %v2126 = vadd.f32 0.0, %v2125
    %v2127 = vpop.f32.mrf.mxu0
    %v2128 = vpop.f32.mrf.mxu0
    %v2129 = vadd.f32 0.0, %v2128
    %v2130 = vpop.f32.mrf.mxu0
    %2131 = vmatprep.mubr.bf16.mxu0 0
    %2132 = vmatmul.mubr.bf16.gmra.mxu0 %v1801
    %v2133 = vpop.f32.mrf.mxu0
    %v2134 = vadd.f32 0.0, %v2133
    %v2135 = vpop.f32.mrf.mxu0
    %v2136 = vpop.f32.mrf.mxu0
    %v2137 = vadd.f32 0.0, %v2136
    %v2138 = vpop.f32.mrf.mxu0
    %2139 = vmatprep.mubr.bf16.mxu0 0
    %2140 = vmatmul.mubr.bf16.gmra.mxu0 %v1802
    %v2141 = vpop.f32.mrf.mxu0
    %v2142 = vadd.f32 0.0, %v2141
    %v2143 = vpop.f32.mrf.mxu0
    %v2144 = vpop.f32.mrf.mxu0
    %v2145 = vadd.f32 0.0, %v2144
    %v2146 = vpop.f32.mrf.mxu0
    %2147 = vdwg.mxu0
    %v2148 = vadd.f32 %v1925, %v2086
    %v2149 = vadd.f32 %v1928, %v2089
    %v2150 = vadd.f32 %v1933, %v2094
    %v2151 = vadd.f32 %v1936, %v2097
    %v2152 = vadd.f32 %v1941, %v2102
    %v2153 = vadd.f32 %v1944, %v2105
    %v2154 = vadd.f32 %v1949, %v2110
    %v2155 = vadd.f32 %v1952, %v2113
    %v2156 = vadd.f32 %v1957, %v2118
    %v2157 = vadd.f32 %v1960, %v2121
    %v2158 = vadd.f32 %v1965, %v2126
    %v2159 = vadd.f32 %v1968, %v2129
    %v2160 = vadd.f32 %v1973, %v2134
    %v2161 = vadd.f32 %v1976, %v2137
    %v2162 = vadd.f32 %v1981, %v2142
    %v2163 = vadd.f32 %v1984, %v2145
    %s2164 = scalar_lea.vmem [#allocation5], 64
    %v2165 = vld [vmem:[%s2164] sm:$0xf]
    %v2166 = vld [vmem:[%s2164 + $0x4] sm:$0xf]
    %v2167 = vld [vmem:[%s2164 + $0x8] sm:$0xf]
    %v2168 = vld [vmem:[%s2164 + $0xc] sm:$0xf]
    %v2169 = vld [vmem:[%s2164 + $0x10] sm:$0xf]
    %v2170 = vld [vmem:[%s2164 + $0x14] sm:$0xf]
    %v2171 = vld [vmem:[%s2164 + $0x18] sm:$0xf]
    %v2172 = vld [vmem:[%s2164 + $0x1c] sm:$0xf]
    %v2173 = vld [vmem:[%s2164 + $0x20] sm:$0xf]
    %v2174 = vld [vmem:[%s2164 + $0x24] sm:$0xf]
    %v2175 = vld [vmem:[%s2164 + $0x28] sm:$0xf]
    %v2176 = vld [vmem:[%s2164 + $0x2c] sm:$0xf]
    %v2177 = vld [vmem:[%s2164 + $0x30] sm:$0xf]
    %v2178 = vld [vmem:[%s2164 + $0x34] sm:$0xf]
    %v2179 = vld [vmem:[%s2164 + $0x38] sm:$0xf]
    %v2180 = vld [vmem:[%s2164 + $0x3c] sm:$0xf]
    %v2197 = vunpack.c.l.b16 %v2165
    %v2198 = vunpack.c.l.b16 %v2166
    %v2199 = vunpack.c.l.b16 %v2167
    %v2200 = vunpack.c.l.b16 %v2168
    %v2201 = vunpack.c.l.b16 %v2169
    %v2202 = vunpack.c.l.b16 %v2170
    %v2203 = vunpack.c.l.b16 %v2171
    %v2204 = vunpack.c.l.b16 %v2172
    %v2205 = vunpack.c.l.b16 %v2173
    %v2206 = vunpack.c.l.b16 %v2174
    %v2207 = vunpack.c.l.b16 %v2175
    %v2208 = vunpack.c.l.b16 %v2176
    %v2209 = vunpack.c.l.b16 %v2177
    %v2210 = vunpack.c.l.b16 %v2178
    %v2211 = vunpack.c.l.b16 %v2179
    %v2212 = vunpack.c.l.b16 %v2180
    %v2213 = vpack.c.b16 %v2198, %v2197
    %v2214 = vpack.c.b16 %v2200, %v2199
    %v2215 = vpack.c.b16 %v2202, %v2201
    %v2216 = vpack.c.b16 %v2204, %v2203
    %v2217 = vpack.c.b16 %v2206, %v2205
    %v2218 = vpack.c.b16 %v2208, %v2207
    %v2219 = vpack.c.b16 %v2210, %v2209
    %v2220 = vpack.c.b16 %v2212, %v2211
    %2229 = vmatprep.subr.bf16.mxu0 0
    %2230 = vmatpush1.bf16.msra.mxu0 %v2220
    %2231 = vmatprep.subr.bf16.mxu0 0
    %2232 = vmatpush1.bf16.msra.mxu0 %v2219
    %2233 = vmatprep.subr.bf16.mxu0 0
    %2234 = vmatpush1.bf16.msra.mxu0 %v2218
    %2235 = vmatprep.subr.bf16.mxu0 0
    %2236 = vmatpush1.bf16.msra.mxu0 %v2217
    %2237 = vmatprep.subr.bf16.mxu0 0
    %2238 = vmatpush1.bf16.msra.mxu0 %v2216
    %2239 = vmatprep.subr.bf16.mxu0 0
    %2240 = vmatpush1.bf16.msra.mxu0 %v2215
    %2241 = vmatprep.subr.bf16.mxu0 0
    %2242 = vmatpush1.bf16.msra.mxu0 %v2214
    %2243 = vmatprep.subr.bf16.mxu0 0
    %2244 = vmatpush1.bf16.msra.mxu0 %v2213
    %2245 = vmatprep.subr.bf16.mxu0 0
    %2246 = vmatpush2.bf16.msra.mxu0 0
    %2247 = vmatprep.subr.bf16.mxu0 0
    %2248 = vmatpush2.bf16.msra.mxu0 0
    %2249 = vmatprep.subr.bf16.mxu0 0
    %2250 = vmatpush2.bf16.msra.mxu0 0
    %2251 = vmatprep.subr.bf16.mxu0 0
    %2252 = vmatpush2.bf16.msra.mxu0 0
    %2253 = vmatprep.subr.bf16.mxu0 0
    %2254 = vmatpush2.bf16.msra.mxu0 0
    %2255 = vmatprep.subr.bf16.mxu0 0
    %2256 = vmatpush2.bf16.msra.mxu0 0
    %2257 = vmatprep.subr.bf16.mxu0 0
    %2258 = vmatpush2.bf16.msra.mxu0 0
    %2259 = vmatprep.subr.bf16.mxu0 0
    %2260 = vmatpush2.bf16.msra.mxu0 0
    %2261 = vmatprep.mubr.bf16.mxu0 0
    %2262 = vmatmul.mubr.bf16.gmra.mxu0 %v1803
    %v2263 = vpop.f32.mrf.mxu0
    %v2264 = vadd.f32 0.0, %v2263
    %v2265 = vpop.f32.mrf.mxu0
    %v2266 = vpop.f32.mrf.mxu0
    %v2267 = vadd.f32 0.0, %v2266
    %v2268 = vpop.f32.mrf.mxu0
    %2269 = vmatprep.mubr.bf16.mxu0 0
    %2270 = vmatmul.mubr.bf16.gmra.mxu0 %v1804
    %v2271 = vpop.f32.mrf.mxu0
    %v2272 = vadd.f32 0.0, %v2271
    %v2273 = vpop.f32.mrf.mxu0
    %v2274 = vpop.f32.mrf.mxu0
    %v2275 = vadd.f32 0.0, %v2274
    %v2276 = vpop.f32.mrf.mxu0
    %2277 = vmatprep.mubr.bf16.mxu0 0
    %2278 = vmatmul.mubr.bf16.gmra.mxu0 %v1805
    %v2279 = vpop.f32.mrf.mxu0
    %v2280 = vadd.f32 0.0, %v2279
    %v2281 = vpop.f32.mrf.mxu0
    %v2282 = vpop.f32.mrf.mxu0
    %v2283 = vadd.f32 0.0, %v2282
    %v2284 = vpop.f32.mrf.mxu0
    %2285 = vmatprep.mubr.bf16.mxu0 0
    %2286 = vmatmul.mubr.bf16.gmra.mxu0 %v1806
    %v2287 = vpop.f32.mrf.mxu0
    %v2288 = vadd.f32 0.0, %v2287
    %v2289 = vpop.f32.mrf.mxu0
    %v2290 = vpop.f32.mrf.mxu0
    %v2291 = vadd.f32 0.0, %v2290
    %v2292 = vpop.f32.mrf.mxu0
    %2293 = vmatprep.mubr.bf16.mxu0 0
    %2294 = vmatmul.mubr.bf16.gmra.mxu0 %v1807
    %v2295 = vpop.f32.mrf.mxu0
    %v2296 = vadd.f32 0.0, %v2295
    %v2297 = vpop.f32.mrf.mxu0
    %v2298 = vpop.f32.mrf.mxu0
    %v2299 = vadd.f32 0.0, %v2298
    %v2300 = vpop.f32.mrf.mxu0
    %2301 = vmatprep.mubr.bf16.mxu0 0
    %2302 = vmatmul.mubr.bf16.gmra.mxu0 %v1808
    %v2303 = vpop.f32.mrf.mxu0
    %v2304 = vadd.f32 0.0, %v2303
    %v2305 = vpop.f32.mrf.mxu0
    %v2306 = vpop.f32.mrf.mxu0
    %v2307 = vadd.f32 0.0, %v2306
    %v2308 = vpop.f32.mrf.mxu0
    %2309 = vmatprep.mubr.bf16.mxu0 0
    %2310 = vmatmul.mubr.bf16.gmra.mxu0 %v1809
    %v2311 = vpop.f32.mrf.mxu0
    %v2312 = vadd.f32 0.0, %v2311
    %v2313 = vpop.f32.mrf.mxu0
    %v2314 = vpop.f32.mrf.mxu0
    %v2315 = vadd.f32 0.0, %v2314
    %v2316 = vpop.f32.mrf.mxu0
    %2317 = vmatprep.mubr.bf16.mxu0 0
    %2318 = vmatmul.mubr.bf16.gmra.mxu0 %v1810
    %v2319 = vpop.f32.mrf.mxu0
    %v2320 = vadd.f32 0.0, %v2319
    %v2321 = vpop.f32.mrf.mxu0
    %v2322 = vpop.f32.mrf.mxu0
    %v2323 = vadd.f32 0.0, %v2322
    %v2324 = vpop.f32.mrf.mxu0
    %2325 = vdwg.mxu0
    %v2326 = vadd.f32 %v2148, %v2264
    %v2327 = vadd.f32 %v2149, %v2267
    %v2328 = vadd.f32 %v2150, %v2272
    %v2329 = vadd.f32 %v2151, %v2275
    %v2330 = vadd.f32 %v2152, %v2280
    %v2331 = vadd.f32 %v2153, %v2283
    %v2332 = vadd.f32 %v2154, %v2288
    %v2333 = vadd.f32 %v2155, %v2291
    %v2334 = vadd.f32 %v2156, %v2296
    %v2335 = vadd.f32 %v2157, %v2299
    %v2336 = vadd.f32 %v2158, %v2304
    %v2337 = vadd.f32 %v2159, %v2307
    %v2338 = vadd.f32 %v2160, %v2312
    %v2339 = vadd.f32 %v2161, %v2315
    %v2340 = vadd.f32 %v2162, %v2320
    %v2341 = vadd.f32 %v2163, %v2323
    %s2342 = scalar_lea.vmem [#allocation5], 128
    %v2343 = vld [vmem:[%s2342] sm:$0xf]
    %v2344 = vld [vmem:[%s2342 + $0x4] sm:$0xf]
    %v2345 = vld [vmem:[%s2342 + $0x8] sm:$0xf]
    %v2346 = vld [vmem:[%s2342 + $0xc] sm:$0xf]
    %v2347 = vld [vmem:[%s2342 + $0x10] sm:$0xf]
    %v2348 = vld [vmem:[%s2342 + $0x14] sm:$0xf]
    %v2349 = vld [vmem:[%s2342 + $0x18] sm:$0xf]
    %v2350 = vld [vmem:[%s2342 + $0x1c] sm:$0xf]
    %v2351 = vld [vmem:[%s2342 + $0x20] sm:$0xf]
    %v2352 = vld [vmem:[%s2342 + $0x24] sm:$0xf]
    %v2353 = vld [vmem:[%s2342 + $0x28] sm:$0xf]
    %v2354 = vld [vmem:[%s2342 + $0x2c] sm:$0xf]
    %v2355 = vld [vmem:[%s2342 + $0x30] sm:$0xf]
    %v2356 = vld [vmem:[%s2342 + $0x34] sm:$0xf]
    %v2357 = vld [vmem:[%s2342 + $0x38] sm:$0xf]
    %v2358 = vld [vmem:[%s2342 + $0x3c] sm:$0xf]
    %v2375 = vunpack.c.l.b16 %v2343
    %v2376 = vunpack.c.l.b16 %v2344
    %v2377 = vunpack.c.l.b16 %v2345
    %v2378 = vunpack.c.l.b16 %v2346
    %v2379 = vunpack.c.l.b16 %v2347
    %v2380 = vunpack.c.l.b16 %v2348
    %v2381 = vunpack.c.l.b16 %v2349
    %v2382 = vunpack.c.l.b16 %v2350
    %v2383 = vunpack.c.l.b16 %v2351
    %v2384 = vunpack.c.l.b16 %v2352
    %v2385 = vunpack.c.l.b16 %v2353
    %v2386 = vunpack.c.l.b16 %v2354
    %v2387 = vunpack.c.l.b16 %v2355
    %v2388 = vunpack.c.l.b16 %v2356
    %v2389 = vunpack.c.l.b16 %v2357
    %v2390 = vunpack.c.l.b16 %v2358
    %v2391 = vpack.c.b16 %v2376, %v2375
    %v2392 = vpack.c.b16 %v2378, %v2377
    %v2393 = vpack.c.b16 %v2380, %v2379
    %v2394 = vpack.c.b16 %v2382, %v2381
    %v2395 = vpack.c.b16 %v2384, %v2383
    %v2396 = vpack.c.b16 %v2386, %v2385
    %v2397 = vpack.c.b16 %v2388, %v2387
    %v2398 = vpack.c.b16 %v2390, %v2389
    %2407 = vmatprep.subr.bf16.mxu0 0
    %2408 = vmatpush1.bf16.msra.mxu0 %v2398
    %2409 = vmatprep.subr.bf16.mxu0 0
    %2410 = vmatpush1.bf16.msra.mxu0 %v2397
    %2411 = vmatprep.subr.bf16.mxu0 0
    %2412 = vmatpush1.bf16.msra.mxu0 %v2396
    %2413 = vmatprep.subr.bf16.mxu0 0
    %2414 = vmatpush1.bf16.msra.mxu0 %v2395
    %2415 = vmatprep.subr.bf16.mxu0 0
    %2416 = vmatpush1.bf16.msra.mxu0 %v2394
    %2417 = vmatprep.subr.bf16.mxu0 0
    %2418 = vmatpush1.bf16.msra.mxu0 %v2393
    %2419 = vmatprep.subr.bf16.mxu0 0
    %2420 = vmatpush1.bf16.msra.mxu0 %v2392
    %2421 = vmatprep.subr.bf16.mxu0 0
    %2422 = vmatpush1.bf16.msra.mxu0 %v2391
    %2423 = vmatprep.subr.bf16.mxu0 0
    %2424 = vmatpush2.bf16.msra.mxu0 0
    %2425 = vmatprep.subr.bf16.mxu0 0
    %2426 = vmatpush2.bf16.msra.mxu0 0
    %2427 = vmatprep.subr.bf16.mxu0 0
    %2428 = vmatpush2.bf16.msra.mxu0 0
    %2429 = vmatprep.subr.bf16.mxu0 0
    %2430 = vmatpush2.bf16.msra.mxu0 0
    %2431 = vmatprep.subr.bf16.mxu0 0
    %2432 = vmatpush2.bf16.msra.mxu0 0
    %2433 = vmatprep.subr.bf16.mxu0 0
    %2434 = vmatpush2.bf16.msra.mxu0 0
    %2435 = vmatprep.subr.bf16.mxu0 0
    %2436 = vmatpush2.bf16.msra.mxu0 0
    %2437 = vmatprep.subr.bf16.mxu0 0
    %2438 = vmatpush2.bf16.msra.mxu0 0
    %2439 = vmatprep.mubr.bf16.mxu0 0
    %2440 = vmatmul.mubr.bf16.gmra.mxu0 %v1811
    %v2441 = vpop.f32.mrf.mxu0
    %v2442 = vadd.f32 0.0, %v2441
    %v2443 = vpop.f32.mrf.mxu0
    %v2444 = vpop.f32.mrf.mxu0
    %v2445 = vadd.f32 0.0, %v2444
    %v2446 = vpop.f32.mrf.mxu0
    %2447 = vmatprep.mubr.bf16.mxu0 0
    %2448 = vmatmul.mubr.bf16.gmra.mxu0 %v1812
    %v2449 = vpop.f32.mrf.mxu0
    %v2450 = vadd.f32 0.0, %v2449
    %v2451 = vpop.f32.mrf.mxu0
    %v2452 = vpop.f32.mrf.mxu0
    %v2453 = vadd.f32 0.0, %v2452
    %v2454 = vpop.f32.mrf.mxu0
    %2455 = vmatprep.mubr.bf16.mxu0 0
    %2456 = vmatmul.mubr.bf16.gmra.mxu0 %v1813
    %v2457 = vpop.f32.mrf.mxu0
    %v2458 = vadd.f32 0.0, %v2457
    %v2459 = vpop.f32.mrf.mxu0
    %v2460 = vpop.f32.mrf.mxu0
    %v2461 = vadd.f32 0.0, %v2460
    %v2462 = vpop.f32.mrf.mxu0
    %2463 = vmatprep.mubr.bf16.mxu0 0
    %2464 = vmatmul.mubr.bf16.gmra.mxu0 %v1814
    %v2465 = vpop.f32.mrf.mxu0
    %v2466 = vadd.f32 0.0, %v2465
    %v2467 = vpop.f32.mrf.mxu0
    %v2468 = vpop.f32.mrf.mxu0
    %v2469 = vadd.f32 0.0, %v2468
    %v2470 = vpop.f32.mrf.mxu0
    %2471 = vmatprep.mubr.bf16.mxu0 0
    %2472 = vmatmul.mubr.bf16.gmra.mxu0 %v1815
    %v2473 = vpop.f32.mrf.mxu0
    %v2474 = vadd.f32 0.0, %v2473
    %v2475 = vpop.f32.mrf.mxu0
    %v2476 = vpop.f32.mrf.mxu0
    %v2477 = vadd.f32 0.0, %v2476
    %v2478 = vpop.f32.mrf.mxu0
    %2479 = vmatprep.mubr.bf16.mxu0 0
    %2480 = vmatmul.mubr.bf16.gmra.mxu0 %v1816
    %v2481 = vpop.f32.mrf.mxu0
    %v2482 = vadd.f32 0.0, %v2481
    %v2483 = vpop.f32.mrf.mxu0
    %v2484 = vpop.f32.mrf.mxu0
    %v2485 = vadd.f32 0.0, %v2484
    %v2486 = vpop.f32.mrf.mxu0
    %2487 = vmatprep.mubr.bf16.mxu0 0
    %2488 = vmatmul.mubr.bf16.gmra.mxu0 %v1817
    %v2489 = vpop.f32.mrf.mxu0
    %v2490 = vadd.f32 0.0, %v2489
    %v2491 = vpop.f32.mrf.mxu0
    %v2492 = vpop.f32.mrf.mxu0
    %v2493 = vadd.f32 0.0, %v2492
    %v2494 = vpop.f32.mrf.mxu0
    %2495 = vmatprep.mubr.bf16.mxu0 0
    %2496 = vmatmul.mubr.bf16.gmra.mxu0 %v1818
    %v2497 = vpop.f32.mrf.mxu0
    %v2498 = vadd.f32 0.0, %v2497
    %v2499 = vpop.f32.mrf.mxu0
    %v2500 = vpop.f32.mrf.mxu0
    %v2501 = vadd.f32 0.0, %v2500
    %v2502 = vpop.f32.mrf.mxu0
    %2503 = vdwg.mxu0
    %v2504 = vadd.f32 %v2326, %v2442
    %v2505 = vadd.f32 %v2327, %v2445
    %v2506 = vadd.f32 %v2328, %v2450
    %v2507 = vadd.f32 %v2329, %v2453
    %v2508 = vadd.f32 %v2330, %v2458
    %v2509 = vadd.f32 %v2331, %v2461
    %v2510 = vadd.f32 %v2332, %v2466
    %v2511 = vadd.f32 %v2333, %v2469
    %v2512 = vadd.f32 %v2334, %v2474
    %v2513 = vadd.f32 %v2335, %v2477
    %v2514 = vadd.f32 %v2336, %v2482
    %v2515 = vadd.f32 %v2337, %v2485
    %v2516 = vadd.f32 %v2338, %v2490
    %v2517 = vadd.f32 %v2339, %v2493
    %v2518 = vadd.f32 %v2340, %v2498
    %v2519 = vadd.f32 %v2341, %v2501
    %2520 = vst [vmem:[#allocation8] sm:$0xff] %v2504
    %2521 = vst [vmem:[#allocation8 + $0x8] sm:$0xff] %v2505
    %2522 = vst [vmem:[#allocation8 + $0x10] sm:$0xff] %v2506
    %2523 = vst [vmem:[#allocation8 + $0x18] sm:$0xff] %v2507
    %2524 = vst [vmem:[#allocation8 + $0x20] sm:$0xff] %v2508
    %2525 = vst [vmem:[#allocation8 + $0x28] sm:$0xff] %v2509
    %2526 = vst [vmem:[#allocation8 + $0x30] sm:$0xff] %v2510
    %2527 = vst [vmem:[#allocation8 + $0x38] sm:$0xff] %v2511
    %2528 = vst [vmem:[#allocation8 + $0x40] sm:$0xff] %v2512
    %2529 = vst [vmem:[#allocation8 + $0x48] sm:$0xff] %v2513
    %2530 = vst [vmem:[#allocation8 + $0x50] sm:$0xff] %v2514
    %2531 = vst [vmem:[#allocation8 + $0x58] sm:$0xff] %v2515
    %2532 = vst [vmem:[#allocation8 + $0x60] sm:$0xff] %v2516
    %2533 = vst [vmem:[#allocation8 + $0x68] sm:$0xff] %v2517
    %2534 = vst [vmem:[#allocation8 + $0x70] sm:$0xff] %v2518
    %2535 = vst [vmem:[#allocation8 + $0x78] sm:$0xff] %v2519
    // Predicated region
    $region42: #{tpu_custom_call.1} parent=1 // pred_check
      _
    $region43: #{tpu_custom_call.1} parent=1 // pred_check_branch
      %2537 = sbr.rel (0) target = $region45
    $region44: #{tpu_custom_call.1} parent=1 // pred_region
      %s2539 = ssub.s32 2048, 2048
      %2540 = vsyncadd [#allocation4], %s2539
      %s2541 = sshll.u32 [#allocation8], 4
      %s2542 = int_to_ptr.vmem [resolvable:$true] %s2541
      %2547 = dma.vmem_to_hbm [thread:$0]  %s2542, 2048, %s7, [#allocation4], 128, 128, 8
    $region45: #{tpu_custom_call.1} parent=1 // pred_fallthru
      _
    // Predicated region
    $region46: #{tpu_custom_call.1} parent=1 // pred_check
      _
    $region47: #{tpu_custom_call.1} parent=1 // pred_check_branch
      %2549 = sbr.rel (0) target = $region49
    $region48: #{tpu_custom_call.1} parent=1 // pred_region
      %2550 = dma.done [#allocation4], 2048
    $region49: #{tpu_custom_call.1} parent=1 // pred_fallthru
      _
    %2551 = vsyncpa [#allocation3], 1
    %2552 = vsyncpa [#allocation6], 1
    %2553 = vsyncpa [#allocation4], 1

</llo_original>
